<compile_context>
chip_gen: v5e
topology: v5e:2x2
jax: 0.10.0
libtpu: 0.0.40
codegen_flags: <defaults>
</compile_context>

<pallas_src>
import functools

import jax
import jax.numpy as jnp
from jax.experimental import pallas as pl
from jax.experimental.pallas import tpu as pltpu


# -----------------------------------------------------------------------------
# Fused encoder-layer kernel (one grid step == Bt batch elements)
# -----------------------------------------------------------------------------
def _encoder_layer_kernel(
    x_ref,                       # (Bt, S, E)   activations (bf16 carry)
    wqkv_ref, bqkv_ref,          # (E, 3E) bf16, (1, 3E) f32   (scale folded into Q)
    wo_ref, bo_ref,              # (E, E) bf16,  (1, E) f32
    ln1_g_ref, ln1_b_ref,        # (1, E) f32,   (1, E) f32
    w1_ref, b1_ref,              # (E, F) bf16,  (1, F) f32
    w2_ref, b2_ref,              # (F, E) bf16,  (1, E) f32
    ln2_g_ref, ln2_b_ref,        # (1, E) f32,   (1, E) f32
    y_ref,                       # (Bt, S, E)   bf16 out
    attn_ref,                    # (Bt, S, S)   f32 head-averaged weights
    *, nhead, eps, mxu_dtype):
    Bt, S, E = x_ref.shape
    dh = E // nhead

    def mm(a, b):
        # 2-D a @ b with low-precision MXU inputs, f32 accumulation.
        return jax.lax.dot_general(
            a.astype(mxu_dtype), b.astype(mxu_dtype),
            dimension_numbers=(((1,), (0,)), ((), ())),
            preferred_element_type=jnp.float32)

    x = x_ref[...].astype(jnp.float32)           # (Bt, S, E) f32
    x2d = x.reshape(Bt * S, E)                   # merged batch*seq slab

    # --- QKV projection: one big (Bt*S, E) @ (E, 3E) matmul -----------------
    qkv = mm(x2d, wqkv_ref[...]) + bqkv_ref[...]      # (Bt*S, 3E) f32
    qkv3 = qkv.reshape(Bt, S, 3 * E)

    # --- multi-head attention: per-head loop, batched over Bt ---------------
    attn_sum = jnp.zeros((Bt, S, S), jnp.float32)
    ao = jnp.zeros((Bt * S, E), jnp.float32)          # out-proj accumulator
    for h in range(nhead):                            # static unroll over heads
        qh = qkv3[:, :, h * dh:(h + 1) * dh]                    # (Bt, S, dh)
        kh = qkv3[:, :, E + h * dh:E + (h + 1) * dh]
        vh = qkv3[:, :, 2 * E + h * dh:2 * E + (h + 1) * dh]
        # scores: contraction on dh, batched over Bt (scale already folded in)
        s = jnp.einsum("bqd,bkd->bqk",
                       qh.astype(mxu_dtype), kh.astype(mxu_dtype),
                       preferred_element_type=jnp.float32)      # (Bt, S, S)
        m = jnp.max(s, axis=-1, keepdims=True)
        p = jnp.exp(s - m)
        p = p / jnp.sum(p, axis=-1, keepdims=True)              # exact softmax
        attn_sum = attn_sum + p
        pv = jnp.einsum("bqk,bkd->bqd",
                        p.astype(mxu_dtype), vh.astype(mxu_dtype),
                        preferred_element_type=jnp.float32)     # (Bt, S, dh)
        # fold this head straight into the output projection (no concatenate)
        ao = ao + mm(pv.reshape(Bt * S, dh), wo_ref[h * dh:(h + 1) * dh, :])

    attn_ref[...] = (attn_sum * (1.0 / nhead)).astype(attn_ref.dtype)

    # --- add & LayerNorm (post-norm), all f32 math ---------------------------
    def add_ln(a, b, g, beta):
        y = a + b
        mu = jnp.mean(y, axis=-1, keepdims=True)
        var = jnp.mean((y - mu) ** 2, axis=-1, keepdims=True)
        return (y - mu) * jax.lax.rsqrt(var + eps) * g + beta

    x1 = add_ln(x2d, ao + bo_ref[...], ln1_g_ref[...], ln1_b_ref[...])

    # --- feed forward --------------------------------------------------------
    h1 = jnp.maximum(mm(x1, w1_ref[...]) + b1_ref[...], 0.0)
    h2 = mm(h1, w2_ref[...]) + b2_ref[...]
    x2 = add_ln(x1, h2, ln2_g_ref[...], ln2_b_ref[...])

    y_ref[...] = x2.reshape(Bt, S, E).astype(y_ref.dtype)


def _full_spec(shape):
    nd = len(shape)
    return pl.BlockSpec(shape, lambda *_: (0,) * nd)


def _pick_batch_tile(B, S, target_rows=512):
    """Largest divisor of B with roughly target_rows rows in the matmul slab."""
    bt = max(1, min(B, target_rows // max(S, 1)))
    while B % bt:
        bt -= 1
    return bt


def _vmem_limit_bytes(Bt, S, E, F):
    """Rough per-call VMEM footprint (bytes) -> explicit scoped limit."""
    w = 2 * (E * 3 * E + E * E + E * F + F * E)            # bf16 weights
    b = 4 * (3 * E + E + F + E + 4 * E)                    # f32 biases + LN params
    io = 2 * 2 * (2 * Bt * S * E) + 2 * 4 * (Bt * S * S)   # x,y (bf16, 2-buf) + attn (f32)
    interm = 4 * (Bt * S * (3 * E + 4 * E + F) + 2 * Bt * S * S)
    est = w + b + io + interm
    return int(min(max(2 * est, 32 << 20), 64 << 20))      # 64 MiB safe on v5e/v6e/v7x


def encoder_layer_forward(x_bse, p, nhead, *, eps=1e-5,
                          mxu_dtype=jnp.bfloat16, out_dtype=jnp.bfloat16,
                          attn_dtype=jnp.float32):
    """One post-norm TransformerEncoderLayer (eval mode). x_bse: (B, S, E)."""
    B, S, E = x_bse.shape
    F = p["lin1_w"].shape[1]
    Bt = _pick_batch_tile(B, S)
    nb = B // Bt

    in_specs = [
        pl.BlockSpec((Bt, S, E), lambda b: (b, 0, 0)),   # activations, per batch tile
        _full_spec((E, 3 * E)), _full_spec((1, 3 * E)),  # QKV weight / bias
        _full_spec((E, E)), _full_spec((1, E)),          # out proj
        _full_spec((1, E)), _full_spec((1, E)),          # LN1 gamma / beta
        _full_spec((E, F)), _full_spec((1, F)),          # lin1
        _full_spec((F, E)), _full_spec((1, E)),          # lin2
        _full_spec((1, E)), _full_spec((1, E)),          # LN2 gamma / beta
    ]
    out_specs = (
        pl.BlockSpec((Bt, S, E), lambda b: (b, 0, 0)),
        pl.BlockSpec((Bt, S, S), lambda b: (b, 0, 0)),
    )
    y, attn = pl.pallas_call(
        functools.partial(_encoder_layer_kernel,
                          nhead=nhead, eps=eps, mxu_dtype=mxu_dtype),
        grid=(nb,),
        in_specs=in_specs,
        out_specs=out_specs,
        out_shape=(
            jax.ShapeDtypeStruct((B, S, E), out_dtype),
            jax.ShapeDtypeStruct((B, S, S), attn_dtype),
        ),
        compiler_params=pltpu.CompilerParams(
            dimension_semantics=("parallel",),            # shard batch tiles over TCs
            vmem_limit_bytes=_vmem_limit_bytes(Bt, S, E, F)),
    )(x_bse,
      p["in_proj_w"], p["in_proj_b"],
      p["out_proj_w"], p["out_proj_b"],
      p["ln1_g"], p["ln1_b"],
      p["lin1_w"], p["lin1_b"],
      p["lin2_w"], p["lin2_b"],
      p["ln2_g"], p["ln2_b"])
    return y, attn


# -----------------------------------------------------------------------------
# Standalone LayerNorm kernel (for the optional final `norm`)
# -----------------------------------------------------------------------------
def _ln_kernel(x_ref, g_ref, b_ref, o_ref, *, eps):
    x = x_ref[...].astype(jnp.float32)
    mu = jnp.mean(x, axis=-1, keepdims=True)
    var = jnp.mean((x - mu) ** 2, axis=-1, keepdims=True)
    o_ref[...] = ((x - mu) * jax.lax.rsqrt(var + eps)
                  * g_ref[...] + b_ref[...]).astype(o_ref.dtype)


def layernorm(x2d, gamma, beta, *, eps=1e-5, block_rows=1024):
    """Row-tiled LayerNorm over the last axis. gamma/beta are (1, E). Returns f32."""
    n, e = x2d.shape
    tm = min(block_rows, n)
    if n % tm != 0:
        tm = n   # TODO(synk): pick a padded/divisor tile for ragged row counts
    return pl.pallas_call(
        functools.partial(_ln_kernel, eps=eps),
        grid=(pl.cdiv(n, tm),),
        in_specs=[pl.BlockSpec((tm, e), lambda i: (i, 0)),
                  pl.BlockSpec((1, e), lambda i: (0, 0)),
                  pl.BlockSpec((1, e), lambda i: (0, 0))],
        out_specs=pl.BlockSpec((tm, e), lambda i: (i, 0)),
        out_shape=jax.ShapeDtypeStruct((n, e), jnp.float32),
        compiler_params=pltpu.CompilerParams(
            dimension_semantics=("parallel",)),
    )(x2d, gamma, beta)


# -----------------------------------------------------------------------------
# Encoder stack (mirrors MyTransformerEncoder.forward, mask=None path)
# -----------------------------------------------------------------------------
def my_transformer_encoder(src, layer_params, nhead, final_norm=None,
                           mxu_dtype=jnp.bfloat16, carry_dtype=jnp.bfloat16):
    """src: (S, B, E) f32. Returns (output (S, B, E) f32, [attn (B, S, S)] per layer)."""
    S, B, E = src.shape
    x = jnp.transpose(src, (1, 0, 2)).astype(carry_dtype)   # (B, S, E), bf16 carry
    attn_list = []
    for p in layer_params:
        x, attn = encoder_layer_forward(x, p, nhead,
                                        mxu_dtype=mxu_dtype, out_dtype=carry_dtype)
        attn_list.append(attn)                   # already head-averaged, f32
    if final_norm is not None:
        x = layernorm(x.reshape(B * S, E),
                      final_norm["g"], final_norm["b"]).reshape(B, S, E)
    else:
        x = x.astype(jnp.float32)
    output = jnp.transpose(x, (1, 0, 2))         # back to (S, B, E), f32
    return output, attn_list


# -----------------------------------------------------------------------------
# Parameter construction / preparation
# -----------------------------------------------------------------------------
def make_layer_params(key, d_model, dim_ff):
    """Math-layout (in_features, out_features) f32 parameters (reference form)."""
    ks = jax.random.split(key, 8)
    w, b = 0.02, 0.01
    return {
        # torch keeps (out, in); we store (in, out) so the hot path never
        # transposes. Convert checkpoints once with .T at import time.
        "in_proj_w": w * jax.random.normal(ks[0], (d_model, 3 * d_model), jnp.float32),
        "in_proj_b": b * jax.random.normal(ks[1], (1, 3 * d_model), jnp.float32),
        "out_proj_w": w * jax.random.normal(ks[2], (d_model, d_model), jnp.float32),
        "out_proj_b": b * jax.random.normal(ks[3], (1, d_model), jnp.float32),
        "ln1_g": jnp.ones((1, d_model), jnp.float32),
        "ln1_b": b * jax.random.normal(ks[4], (1, d_model), jnp.float32),
        "lin1_w": w * jax.random.normal(ks[5], (d_model, dim_ff), jnp.float32),
        "lin1_b": b * jax.random.normal(ks[6], (1, dim_ff), jnp.float32),
        "lin2_w": w * jax.random.normal(ks[7], (dim_ff, d_model), jnp.float32),
        "lin2_b": jnp.zeros((1, d_model), jnp.float32),
        "ln2_g": jnp.ones((1, d_model), jnp.float32),
        "ln2_b": jnp.zeros((1, d_model), jnp.float32),
    }


def prepare_layer_params(p, nhead, weight_dtype=jnp.bfloat16):
    """One-time prep: fold 1/sqrt(dh) into Q columns, cast big weights to bf16."""
    E = p["in_proj_w"].shape[0]
    dh = E // nhead
    scale = 1.0 / (dh ** 0.5)
    in_w = p["in_proj_w"].at[:, :E].multiply(scale)
    in_b = p["in_proj_b"].at[:, :E].multiply(scale)
    return {
        "in_proj_w": in_w.astype(weight_dtype),
        "in_proj_b": in_b,                                   # biases stay f32 (tiny)
        "out_proj_w": p["out_proj_w"].astype(weight_dtype),
        "out_proj_b": p["out_proj_b"],
        "ln1_g": p["ln1_g"], "ln1_b": p["ln1_b"],
        "lin1_w": p["lin1_w"].astype(weight_dtype), "lin1_b": p["lin1_b"],
        "lin2_w": p["lin2_w"].astype(weight_dtype), "lin2_b": p["lin2_b"],
        "ln2_g": p["ln2_g"], "ln2_b": p["ln2_b"],
    }


# -----------------------------------------------------------------------------
# Pure-JAX f32 reference (for correctness check only)
# -----------------------------------------------------------------------------
def _reference_encoder(src, layer_params, nhead, eps=1e-5):
    def ln(y, g, b):
        mu = y.mean(-1, keepdims=True)
        var = ((y - mu) ** 2).mean(-1, keepdims=True)
        return (y - mu) / jnp.sqrt(var + eps) * g + b

    x = jnp.transpose(src, (1, 0, 2))            # (B, S, E)
    B, S, E = x.shape
    dh = E // nhead
    attn_list = []
    for p in layer_params:
        qkv = x @ p["in_proj_w"] + p["in_proj_b"]
        q, k, v = jnp.split(qkv, 3, axis=-1)

        def heads(t):
            return t.reshape(B, S, nhead, dh).transpose(0, 2, 1, 3)

        qh, kh, vh = heads(q), heads(k), heads(v)
        s = jnp.einsum("bhqd,bhkd->bhqk", qh, kh) / (dh ** 0.5)
        pa = jax.nn.softmax(s, axis=-1)
        o = jnp.einsum("bhqk,bhkd->bhqd", pa, vh)
        o = o.transpose(0, 2, 1, 3).reshape(B, S, E)
        ao = o @ p["out_proj_w"] + p["out_proj_b"]
        x1 = ln(x + ao, p["ln1_g"], p["ln1_b"])
        h = jax.nn.relu(x1 @ p["lin1_w"] + p["lin1_b"])
        h = h @ p["lin2_w"] + p["lin2_b"]
        x = ln(x1 + h, p["ln2_g"], p["ln2_b"])
        attn_list.append(pa.mean(axis=1))
    return jnp.transpose(x, (1, 0, 2)), attn_list


# -----------------------------------------------------------------------------
if __name__ == "__main__":
    S, B, E = 8, 2, 32          # seq, batch, d_model
    NHEAD, FF, NUM_LAYERS = 4, 64, 2

    key = jax.random.PRNGKey(0)
    k_src, *k_layers = jax.random.split(key, NUM_LAYERS + 1)

    src = jax.random.normal(k_src, (S, B, E), jnp.float32)
    raw_params = [make_layer_params(k, E, FF) for k in k_layers]
    kernel_params = [prepare_layer_params(p, NHEAD) for p in raw_params]

    fwd = jax.jit(functools.partial(my_transformer_encoder,
                                    nhead=NHEAD, final_norm=None))
    out, attn_list = fwd(src, kernel_params)
    out = jax.block_until_ready(out)
    attn_list = [jax.block_until_ready(a) for a in attn_list]

    assert out.shape == (S, B, E)
    assert out.dtype == jnp.float32
    assert len(attn_list) == NUM_LAYERS
    assert all(a.shape == (B, S, S) for a in attn_list)
    # exact softmax division -> rows sum to 1 (f32 rounding only)
    assert jnp.allclose(jnp.sum(attn_list[0], axis=-1), 1.0, atol=1e-3)
    assert jnp.allclose(jnp.sum(attn_list[-1], axis=-1), 1.0, atol=1e-3)

    # numerical check vs f32 reference (bf16 MXU inputs / bf16 activation carry)
    ref_out, ref_attn = _reference_encoder(src, raw_params, NHEAD)
    assert jnp.allclose(out, ref_out, atol=5e-2), \
        float(jnp.max(jnp.abs(out - ref_out)))
    assert jnp.allclose(attn_list[0], ref_attn[0], atol=2e-2)
    assert jnp.allclose(attn_list[-1], ref_attn[-1], atol=2e-2)

    # exercise the standalone final-norm kernel (used when `norm is not None`)
    ln_out = layernorm(out.reshape(S * B, E),
                       jnp.ones((1, E), jnp.float32),
                       jnp.zeros((1, E), jnp.float32))
    ln_out = jax.block_until_ready(ln_out)
    assert ln_out.shape == (S * B, E)

    print("KERNEL_OK")
</pallas_src>

<mosaic_0001>
module attributes {stable_mosaic.version = 11 : i64} {
  func.func @_encoder_layer_kernel(%arg0: i32, %arg1: memref<2x8x32xbf16, #tpu.memory_space<vmem>>, %arg2: memref<32x96xbf16, #tpu.memory_space<vmem>>, %arg3: memref<1x96xf32, #tpu.memory_space<vmem>>, %arg4: memref<32x32xbf16, #tpu.memory_space<vmem>>, %arg5: memref<1x32xf32, #tpu.memory_space<vmem>>, %arg6: memref<1x32xf32, #tpu.memory_space<vmem>>, %arg7: memref<1x32xf32, #tpu.memory_space<vmem>>, %arg8: memref<32x64xbf16, #tpu.memory_space<vmem>>, %arg9: memref<1x64xf32, #tpu.memory_space<vmem>>, %arg10: memref<64x32xbf16, #tpu.memory_space<vmem>>, %arg11: memref<1x32xf32, #tpu.memory_space<vmem>>, %arg12: memref<1x32xf32, #tpu.memory_space<vmem>>, %arg13: memref<1x32xf32, #tpu.memory_space<vmem>>, %arg14: memref<2x8x32xbf16, #tpu.memory_space<vmem>>, %arg15: memref<2x8x8xf32, #tpu.memory_space<vmem>>) attributes {dimension_semantics = [#tpu.dimension_semantics<parallel>], iteration_bounds = array<i64: 1>, scalar_prefetch = 0 : i64, scratch_operands = 0 : i64, tpu.core_type = #tpu.core_type<tc>, window_params = [{transform_indices = @transform_0, window_bounds = array<i64: 2, 8, 32>}, {pipeline_mode = #tpu.pipeline_mode<synchronous>, transform_indices = @transform_1, window_bounds = array<i64: 32, 96>}, {pipeline_mode = #tpu.pipeline_mode<synchronous>, transform_indices = @transform_2, window_bounds = array<i64: 1, 96>}, {pipeline_mode = #tpu.pipeline_mode<synchronous>, transform_indices = @transform_3, window_bounds = array<i64: 32, 32>}, {pipeline_mode = #tpu.pipeline_mode<synchronous>, transform_indices = @transform_4, window_bounds = array<i64: 1, 32>}, {pipeline_mode = #tpu.pipeline_mode<synchronous>, transform_indices = @transform_5, window_bounds = array<i64: 1, 32>}, {pipeline_mode = #tpu.pipeline_mode<synchronous>, transform_indices = @transform_6, window_bounds = array<i64: 1, 32>}, {pipeline_mode = #tpu.pipeline_mode<synchronous>, transform_indices = @transform_7, window_bounds = array<i64: 32, 64>}, {pipeline_mode = #tpu.pipeline_mode<synchronous>, transform_indices = @transform_8, window_bounds = array<i64: 1, 64>}, {pipeline_mode = #tpu.pipeline_mode<synchronous>, transform_indices = @transform_9, window_bounds = array<i64: 64, 32>}, {pipeline_mode = #tpu.pipeline_mode<synchronous>, transform_indices = @transform_10, window_bounds = array<i64: 1, 32>}, {pipeline_mode = #tpu.pipeline_mode<synchronous>, transform_indices = @transform_11, window_bounds = array<i64: 1, 32>}, {pipeline_mode = #tpu.pipeline_mode<synchronous>, transform_indices = @transform_12, window_bounds = array<i64: 1, 32>}, {transform_indices = @transform_13, window_bounds = array<i64: 2, 8, 32>}, {transform_indices = @transform_14, window_bounds = array<i64: 2, 8, 8>}]} {
    %c0 = arith.constant 0 : index
    %c0_0 = arith.constant 0 : index
    %c0_1 = arith.constant 0 : index
    %0 = vector.load %arg1[%c0, %c0_0, %c0_1] : memref<2x8x32xbf16, #tpu.memory_space<vmem>>, vector<2x8x32xbf16>
    %1 = arith.extf %0 : vector<2x8x32xbf16> to vector<2x8x32xf32>
    %2 = vector.shape_cast %1 : vector<2x8x32xf32> to vector<16x32xf32>
    %c0_2 = arith.constant 0 : index
    %c0_3 = arith.constant 0 : index
    %3 = vector.load %arg2[%c0_2, %c0_3] : memref<32x96xbf16, #tpu.memory_space<vmem>>, vector<32x96xbf16>
    %4 = arith.truncf %2 : vector<16x32xf32> to vector<16x32xbf16>
    %cst = arith.constant dense<0.000000e+00> : vector<16x96xf32>
    %5 = tpu.matmul %4, %3, %cst {dimension_numbers = #tpu.dot_dimension_numbers<[1], [0], [0], [1], [0, 0, 1, 1], [], []>} : vector<16x32xbf16>, vector<32x96xbf16>, vector<16x96xf32> -> vector<16x96xf32>
    %c0_4 = arith.constant 0 : index
    %c0_5 = arith.constant 0 : index
    %6 = vector.load %arg3[%c0_4, %c0_5] : memref<1x96xf32, #tpu.memory_space<vmem>>, vector<1x96xf32>
    %7 = vector.broadcast %6 : vector<1x96xf32> to vector<16x96xf32>
    %8 = arith.addf %5, %7 : vector<16x96xf32>
    %9 = vector.shape_cast %8 : vector<16x96xf32> to vector<2x8x96xf32>
    %cst_6 = arith.constant 0.000000e+00 : f32
    %10 = vector.broadcast %cst_6 : f32 to vector<2x8x8xf32>
    %cst_7 = arith.constant 0.000000e+00 : f32
    %11 = vector.broadcast %cst_7 : f32 to vector<16x32xf32>
    %12 = vector.extract_strided_slice %9 {offsets = [0, 0, 0], sizes = [2, 8, 8], strides = [1, 1, 1]} : vector<2x8x96xf32> to vector<2x8x8xf32>
    %13 = vector.extract_strided_slice %9 {offsets = [0, 0, 32], sizes = [2, 8, 8], strides = [1, 1, 1]} : vector<2x8x96xf32> to vector<2x8x8xf32>
    %14 = vector.extract_strided_slice %9 {offsets = [0, 0, 64], sizes = [2, 8, 8], strides = [1, 1, 1]} : vector<2x8x96xf32> to vector<2x8x8xf32>
    %15 = arith.truncf %12 : vector<2x8x8xf32> to vector<2x8x8xbf16>
    %16 = arith.truncf %13 : vector<2x8x8xf32> to vector<2x8x8xbf16>
    "tpu.trace_start"() <{level = 10 : i32, message = "bqd,bkd->bqk"}> : () -> ()
    %cst_8 = arith.constant dense<0.000000e+00> : vector<2x8x8xf32>
    %17 = tpu.matmul %15, %16, %cst_8 {dimension_numbers = #tpu.dot_dimension_numbers<[2], [2], [1], [1], [0, 0, 0, 1, 1, 1], [0], [0]>} : vector<2x8x8xbf16>, vector<2x8x8xbf16>, vector<2x8x8xf32> -> vector<2x8x8xf32>
    "tpu.trace_stop"() : () -> ()
    %cst_9 = arith.constant dense<0xFF800000> : vector<2x8xf32>
    %18 = vector.multi_reduction <maximumf>, %17, %cst_9 [2] : vector<2x8x8xf32> to vector<2x8xf32>
    %19 = vector.shape_cast %18 : vector<2x8xf32> to vector<2x8x1xf32>
    %20 = vector.broadcast %19 : vector<2x8x1xf32> to vector<2x8x8xf32>
    %21 = arith.subf %17, %20 : vector<2x8x8xf32>
    %22 = math.exp %21 : vector<2x8x8xf32>
    %cst_10 = arith.constant dense<0.000000e+00> : vector<2x8xf32>
    %23 = vector.multi_reduction <add>, %22, %cst_10 [2] : vector<2x8x8xf32> to vector<2x8xf32>
    %24 = vector.shape_cast %23 : vector<2x8xf32> to vector<2x8x1xf32>
    %25 = vector.broadcast %24 : vector<2x8x1xf32> to vector<2x8x8xf32>
    %26 = arith.divf %22, %25 : vector<2x8x8xf32>
    %27 = arith.addf %10, %26 : vector<2x8x8xf32>
    %28 = arith.truncf %26 : vector<2x8x8xf32> to vector<2x8x8xbf16>
    %29 = arith.truncf %14 : vector<2x8x8xf32> to vector<2x8x8xbf16>
    "tpu.trace_start"() <{level = 10 : i32, message = "bqk,bkd->bqd"}> : () -> ()
    %cst_11 = arith.constant dense<0.000000e+00> : vector<2x8x8xf32>
    %30 = tpu.matmul %28, %29, %cst_11 {dimension_numbers = #tpu.dot_dimension_numbers<[2], [1], [1], [2], [0, 0, 0, 1, 1, 2], [0], [0]>} : vector<2x8x8xbf16>, vector<2x8x8xbf16>, vector<2x8x8xf32> -> vector<2x8x8xf32>
    "tpu.trace_stop"() : () -> ()
    %31 = vector.shape_cast %30 : vector<2x8x8xf32> to vector<16x8xf32>
    %c0_12 = arith.constant 0 : index
    %c0_13 = arith.constant 0 : index
    %32 = vector.load %arg4[%c0_12, %c0_13] : memref<32x32xbf16, #tpu.memory_space<vmem>>, vector<8x32xbf16>
    %33 = arith.truncf %31 : vector<16x8xf32> to vector<16x8xbf16>
    %cst_14 = arith.constant dense<0.000000e+00> : vector<16x32xf32>
    %34 = tpu.matmul %33, %32, %cst_14 {dimension_numbers = #tpu.dot_dimension_numbers<[1], [0], [0], [1], [0, 0, 1, 1], [], []>} : vector<16x8xbf16>, vector<8x32xbf16>, vector<16x32xf32> -> vector<16x32xf32>
    %35 = arith.addf %11, %34 : vector<16x32xf32>
    %36 = vector.extract_strided_slice %9 {offsets = [0, 0, 8], sizes = [2, 8, 8], strides = [1, 1, 1]} : vector<2x8x96xf32> to vector<2x8x8xf32>
    %37 = vector.extract_strided_slice %9 {offsets = [0, 0, 40], sizes = [2, 8, 8], strides = [1, 1, 1]} : vector<2x8x96xf32> to vector<2x8x8xf32>
    %38 = vector.extract_strided_slice %9 {offsets = [0, 0, 72], sizes = [2, 8, 8], strides = [1, 1, 1]} : vector<2x8x96xf32> to vector<2x8x8xf32>
    %39 = arith.truncf %36 : vector<2x8x8xf32> to vector<2x8x8xbf16>
    %40 = arith.truncf %37 : vector<2x8x8xf32> to vector<2x8x8xbf16>
    "tpu.trace_start"() <{level = 10 : i32, message = "bqd,bkd->bqk"}> : () -> ()
    %cst_15 = arith.constant dense<0.000000e+00> : vector<2x8x8xf32>
    %41 = tpu.matmul %39, %40, %cst_15 {dimension_numbers = #tpu.dot_dimension_numbers<[2], [2], [1], [1], [0, 0, 0, 1, 1, 1], [0], [0]>} : vector<2x8x8xbf16>, vector<2x8x8xbf16>, vector<2x8x8xf32> -> vector<2x8x8xf32>
    "tpu.trace_stop"() : () -> ()
    %cst_16 = arith.constant dense<0xFF800000> : vector<2x8xf32>
    %42 = vector.multi_reduction <maximumf>, %41, %cst_16 [2] : vector<2x8x8xf32> to vector<2x8xf32>
    %43 = vector.shape_cast %42 : vector<2x8xf32> to vector<2x8x1xf32>
    %44 = vector.broadcast %43 : vector<2x8x1xf32> to vector<2x8x8xf32>
    %45 = arith.subf %41, %44 : vector<2x8x8xf32>
    %46 = math.exp %45 : vector<2x8x8xf32>
    %cst_17 = arith.constant dense<0.000000e+00> : vector<2x8xf32>
    %47 = vector.multi_reduction <add>, %46, %cst_17 [2] : vector<2x8x8xf32> to vector<2x8xf32>
    %48 = vector.shape_cast %47 : vector<2x8xf32> to vector<2x8x1xf32>
    %49 = vector.broadcast %48 : vector<2x8x1xf32> to vector<2x8x8xf32>
    %50 = arith.divf %46, %49 : vector<2x8x8xf32>
    %51 = arith.addf %27, %50 : vector<2x8x8xf32>
    %52 = arith.truncf %50 : vector<2x8x8xf32> to vector<2x8x8xbf16>
    %53 = arith.truncf %38 : vector<2x8x8xf32> to vector<2x8x8xbf16>
    "tpu.trace_start"() <{level = 10 : i32, message = "bqk,bkd->bqd"}> : () -> ()
    %cst_18 = arith.constant dense<0.000000e+00> : vector<2x8x8xf32>
    %54 = tpu.matmul %52, %53, %cst_18 {dimension_numbers = #tpu.dot_dimension_numbers<[2], [1], [1], [2], [0, 0, 0, 1, 1, 2], [0], [0]>} : vector<2x8x8xbf16>, vector<2x8x8xbf16>, vector<2x8x8xf32> -> vector<2x8x8xf32>
    "tpu.trace_stop"() : () -> ()
    %55 = vector.shape_cast %54 : vector<2x8x8xf32> to vector<16x8xf32>
    %c8 = arith.constant 8 : index
    %c0_19 = arith.constant 0 : index
    %56 = vector.load %arg4[%c8, %c0_19] : memref<32x32xbf16, #tpu.memory_space<vmem>>, vector<8x32xbf16>
    %57 = arith.truncf %55 : vector<16x8xf32> to vector<16x8xbf16>
    %cst_20 = arith.constant dense<0.000000e+00> : vector<16x32xf32>
    %58 = tpu.matmul %57, %56, %cst_20 {dimension_numbers = #tpu.dot_dimension_numbers<[1], [0], [0], [1], [0, 0, 1, 1], [], []>} : vector<16x8xbf16>, vector<8x32xbf16>, vector<16x32xf32> -> vector<16x32xf32>
    %59 = arith.addf %35, %58 : vector<16x32xf32>
    %60 = vector.extract_strided_slice %9 {offsets = [0, 0, 16], sizes = [2, 8, 8], strides = [1, 1, 1]} : vector<2x8x96xf32> to vector<2x8x8xf32>
    %61 = vector.extract_strided_slice %9 {offsets = [0, 0, 48], sizes = [2, 8, 8], strides = [1, 1, 1]} : vector<2x8x96xf32> to vector<2x8x8xf32>
    %62 = vector.extract_strided_slice %9 {offsets = [0, 0, 80], sizes = [2, 8, 8], strides = [1, 1, 1]} : vector<2x8x96xf32> to vector<2x8x8xf32>
    %63 = arith.truncf %60 : vector<2x8x8xf32> to vector<2x8x8xbf16>
    %64 = arith.truncf %61 : vector<2x8x8xf32> to vector<2x8x8xbf16>
    "tpu.trace_start"() <{level = 10 : i32, message = "bqd,bkd->bqk"}> : () -> ()
    %cst_21 = arith.constant dense<0.000000e+00> : vector<2x8x8xf32>
    %65 = tpu.matmul %63, %64, %cst_21 {dimension_numbers = #tpu.dot_dimension_numbers<[2], [2], [1], [1], [0, 0, 0, 1, 1, 1], [0], [0]>} : vector<2x8x8xbf16>, vector<2x8x8xbf16>, vector<2x8x8xf32> -> vector<2x8x8xf32>
    "tpu.trace_stop"() : () -> ()
    %cst_22 = arith.constant dense<0xFF800000> : vector<2x8xf32>
    %66 = vector.multi_reduction <maximumf>, %65, %cst_22 [2] : vector<2x8x8xf32> to vector<2x8xf32>
    %67 = vector.shape_cast %66 : vector<2x8xf32> to vector<2x8x1xf32>
    %68 = vector.broadcast %67 : vector<2x8x1xf32> to vector<2x8x8xf32>
    %69 = arith.subf %65, %68 : vector<2x8x8xf32>
    %70 = math.exp %69 : vector<2x8x8xf32>
    %cst_23 = arith.constant dense<0.000000e+00> : vector<2x8xf32>
    %71 = vector.multi_reduction <add>, %70, %cst_23 [2] : vector<2x8x8xf32> to vector<2x8xf32>
    %72 = vector.shape_cast %71 : vector<2x8xf32> to vector<2x8x1xf32>
    %73 = vector.broadcast %72 : vector<2x8x1xf32> to vector<2x8x8xf32>
    %74 = arith.divf %70, %73 : vector<2x8x8xf32>
    %75 = arith.addf %51, %74 : vector<2x8x8xf32>
    %76 = arith.truncf %74 : vector<2x8x8xf32> to vector<2x8x8xbf16>
    %77 = arith.truncf %62 : vector<2x8x8xf32> to vector<2x8x8xbf16>
    "tpu.trace_start"() <{level = 10 : i32, message = "bqk,bkd->bqd"}> : () -> ()
    %cst_24 = arith.constant dense<0.000000e+00> : vector<2x8x8xf32>
    %78 = tpu.matmul %76, %77, %cst_24 {dimension_numbers = #tpu.dot_dimension_numbers<[2], [1], [1], [2], [0, 0, 0, 1, 1, 2], [0], [0]>} : vector<2x8x8xbf16>, vector<2x8x8xbf16>, vector<2x8x8xf32> -> vector<2x8x8xf32>
    "tpu.trace_stop"() : () -> ()
    %79 = vector.shape_cast %78 : vector<2x8x8xf32> to vector<16x8xf32>
    %c16 = arith.constant 16 : index
    %c0_25 = arith.constant 0 : index
    %80 = vector.load %arg4[%c16, %c0_25] : memref<32x32xbf16, #tpu.memory_space<vmem>>, vector<8x32xbf16>
    %81 = arith.truncf %79 : vector<16x8xf32> to vector<16x8xbf16>
    %cst_26 = arith.constant dense<0.000000e+00> : vector<16x32xf32>
    %82 = tpu.matmul %81, %80, %cst_26 {dimension_numbers = #tpu.dot_dimension_numbers<[1], [0], [0], [1], [0, 0, 1, 1], [], []>} : vector<16x8xbf16>, vector<8x32xbf16>, vector<16x32xf32> -> vector<16x32xf32>
    %83 = arith.addf %59, %82 : vector<16x32xf32>
    %84 = vector.extract_strided_slice %9 {offsets = [0, 0, 24], sizes = [2, 8, 8], strides = [1, 1, 1]} : vector<2x8x96xf32> to vector<2x8x8xf32>
    %85 = vector.extract_strided_slice %9 {offsets = [0, 0, 56], sizes = [2, 8, 8], strides = [1, 1, 1]} : vector<2x8x96xf32> to vector<2x8x8xf32>
    %86 = vector.extract_strided_slice %9 {offsets = [0, 0, 88], sizes = [2, 8, 8], strides = [1, 1, 1]} : vector<2x8x96xf32> to vector<2x8x8xf32>
    %87 = arith.truncf %84 : vector<2x8x8xf32> to vector<2x8x8xbf16>
    %88 = arith.truncf %85 : vector<2x8x8xf32> to vector<2x8x8xbf16>
    "tpu.trace_start"() <{level = 10 : i32, message = "bqd,bkd->bqk"}> : () -> ()
    %cst_27 = arith.constant dense<0.000000e+00> : vector<2x8x8xf32>
    %89 = tpu.matmul %87, %88, %cst_27 {dimension_numbers = #tpu.dot_dimension_numbers<[2], [2], [1], [1], [0, 0, 0, 1, 1, 1], [0], [0]>} : vector<2x8x8xbf16>, vector<2x8x8xbf16>, vector<2x8x8xf32> -> vector<2x8x8xf32>
    "tpu.trace_stop"() : () -> ()
    %cst_28 = arith.constant dense<0xFF800000> : vector<2x8xf32>
    %90 = vector.multi_reduction <maximumf>, %89, %cst_28 [2] : vector<2x8x8xf32> to vector<2x8xf32>
    %91 = vector.shape_cast %90 : vector<2x8xf32> to vector<2x8x1xf32>
    %92 = vector.broadcast %91 : vector<2x8x1xf32> to vector<2x8x8xf32>
    %93 = arith.subf %89, %92 : vector<2x8x8xf32>
    %94 = math.exp %93 : vector<2x8x8xf32>
    %cst_29 = arith.constant dense<0.000000e+00> : vector<2x8xf32>
    %95 = vector.multi_reduction <add>, %94, %cst_29 [2] : vector<2x8x8xf32> to vector<2x8xf32>
    %96 = vector.shape_cast %95 : vector<2x8xf32> to vector<2x8x1xf32>
    %97 = vector.broadcast %96 : vector<2x8x1xf32> to vector<2x8x8xf32>
    %98 = arith.divf %94, %97 : vector<2x8x8xf32>
    %99 = arith.addf %75, %98 : vector<2x8x8xf32>
    %100 = arith.truncf %98 : vector<2x8x8xf32> to vector<2x8x8xbf16>
    %101 = arith.truncf %86 : vector<2x8x8xf32> to vector<2x8x8xbf16>
    "tpu.trace_start"() <{level = 10 : i32, message = "bqk,bkd->bqd"}> : () -> ()
    %cst_30 = arith.constant dense<0.000000e+00> : vector<2x8x8xf32>
    %102 = tpu.matmul %100, %101, %cst_30 {dimension_numbers = #tpu.dot_dimension_numbers<[2], [1], [1], [2], [0, 0, 0, 1, 1, 2], [0], [0]>} : vector<2x8x8xbf16>, vector<2x8x8xbf16>, vector<2x8x8xf32> -> vector<2x8x8xf32>
    "tpu.trace_stop"() : () -> ()
    %103 = vector.shape_cast %102 : vector<2x8x8xf32> to vector<16x8xf32>
    %c24 = arith.constant 24 : index
    %c0_31 = arith.constant 0 : index
    %104 = vector.load %arg4[%c24, %c0_31] : memref<32x32xbf16, #tpu.memory_space<vmem>>, vector<8x32xbf16>
    %105 = arith.truncf %103 : vector<16x8xf32> to vector<16x8xbf16>
    %cst_32 = arith.constant dense<0.000000e+00> : vector<16x32xf32>
    %106 = tpu.matmul %105, %104, %cst_32 {dimension_numbers = #tpu.dot_dimension_numbers<[1], [0], [0], [1], [0, 0, 1, 1], [], []>} : vector<16x8xbf16>, vector<8x32xbf16>, vector<16x32xf32> -> vector<16x32xf32>
    %107 = arith.addf %83, %106 : vector<16x32xf32>
    %cst_33 = arith.constant 2.500000e-01 : f32
    %108 = vector.broadcast %cst_33 : f32 to vector<2x8x8xf32>
    %109 = arith.mulf %99, %108 : vector<2x8x8xf32>
    %c0_34 = arith.constant 0 : index
    %c0_35 = arith.constant 0 : index
    %c0_36 = arith.constant 0 : index
    %110 = vector.load %arg15[%c0_34, %c0_35, %c0_36] : memref<2x8x8xf32, #tpu.memory_space<vmem>>, vector<2x8x8xf32>
    tpu.vector_store %arg15[%c0_34, %c0_35, %c0_36], %109 {strides = array<i32>} : memref<2x8x8xf32, #tpu.memory_space<vmem>>, vector<2x8x8xf32>,
    %c0_37 = arith.constant 0 : index
    %c0_38 = arith.constant 0 : index
    %111 = vector.load %arg5[%c0_37, %c0_38] : memref<1x32xf32, #tpu.memory_space<vmem>>, vector<1x32xf32>
    %112 = vector.broadcast %111 : vector<1x32xf32> to vector<16x32xf32>
    %113 = arith.addf %107, %112 : vector<16x32xf32>
    %c0_39 = arith.constant 0 : index
    %c0_40 = arith.constant 0 : index
    %114 = vector.load %arg6[%c0_39, %c0_40] : memref<1x32xf32, #tpu.memory_space<vmem>>, vector<1x32xf32>
    %c0_41 = arith.constant 0 : index
    %c0_42 = arith.constant 0 : index
    %115 = vector.load %arg7[%c0_41, %c0_42] : memref<1x32xf32, #tpu.memory_space<vmem>>, vector<1x32xf32>
    %116 = arith.addf %2, %113 : vector<16x32xf32>
    %cst_43 = arith.constant dense<0.000000e+00> : vector<16xf32>
    %117 = vector.multi_reduction <add>, %116, %cst_43 [1] : vector<16x32xf32> to vector<16xf32>
    %118 = vector.shape_cast %117 : vector<16xf32> to vector<16x1xf32>
    %cst_44 = arith.constant 3.200000e+01 : f32
    %119 = vector.broadcast %cst_44 : f32 to vector<16x1xf32>
    %120 = arith.divf %118, %119 : vector<16x1xf32>
    %121 = vector.broadcast %120 : vector<16x1xf32> to vector<16x32xf32>
    %122 = arith.subf %116, %121 : vector<16x32xf32>
    %123 = arith.mulf %122, %122 : vector<16x32xf32>
    %cst_45 = arith.constant dense<0.000000e+00> : vector<16xf32>
    %124 = vector.multi_reduction <add>, %123, %cst_45 [1] : vector<16x32xf32> to vector<16xf32>
    %125 = vector.shape_cast %124 : vector<16xf32> to vector<16x1xf32>
    %cst_46 = arith.constant 3.200000e+01 : f32
    %126 = vector.broadcast %cst_46 : f32 to vector<16x1xf32>
    %127 = arith.divf %125, %126 : vector<16x1xf32>
    %128 = vector.broadcast %120 : vector<16x1xf32> to vector<16x32xf32>
    %129 = arith.subf %116, %128 : vector<16x32xf32>
    %cst_47 = arith.constant 9.99999974E-6 : f32
    %130 = vector.broadcast %cst_47 : f32 to vector<16x1xf32>
    %131 = arith.addf %127, %130 : vector<16x1xf32>
    %132 = math.rsqrt %131 : vector<16x1xf32>
    %133 = vector.broadcast %132 : vector<16x1xf32> to vector<16x32xf32>
    %134 = arith.mulf %129, %133 : vector<16x32xf32>
    %135 = vector.broadcast %114 : vector<1x32xf32> to vector<16x32xf32>
    %136 = arith.mulf %134, %135 : vector<16x32xf32>
    %137 = vector.broadcast %115 : vector<1x32xf32> to vector<16x32xf32>
    %138 = arith.addf %136, %137 : vector<16x32xf32>
    %c0_48 = arith.constant 0 : index
    %c0_49 = arith.constant 0 : index
    %139 = vector.load %arg8[%c0_48, %c0_49] : memref<32x64xbf16, #tpu.memory_space<vmem>>, vector<32x64xbf16>
    %140 = arith.truncf %138 : vector<16x32xf32> to vector<16x32xbf16>
    %cst_50 = arith.constant dense<0.000000e+00> : vector<16x64xf32>
    %141 = tpu.matmul %140, %139, %cst_50 {dimension_numbers = #tpu.dot_dimension_numbers<[1], [0], [0], [1], [0, 0, 1, 1], [], []>} : vector<16x32xbf16>, vector<32x64xbf16>, vector<16x64xf32> -> vector<16x64xf32>
    %c0_51 = arith.constant 0 : index
    %c0_52 = arith.constant 0 : index
    %142 = vector.load %arg9[%c0_51, %c0_52] : memref<1x64xf32, #tpu.memory_space<vmem>>, vector<1x64xf32>
    %143 = vector.broadcast %142 : vector<1x64xf32> to vector<16x64xf32>
    %144 = arith.addf %141, %143 : vector<16x64xf32>
    %cst_53 = arith.constant 0.000000e+00 : f32
    %145 = vector.broadcast %cst_53 : f32 to vector<16x64xf32>
    %146 = arith.maximumf %144, %145 : vector<16x64xf32>
    %c0_54 = arith.constant 0 : index
    %c0_55 = arith.constant 0 : index
    %147 = vector.load %arg10[%c0_54, %c0_55] : memref<64x32xbf16, #tpu.memory_space<vmem>>, vector<64x32xbf16>
    %148 = arith.truncf %146 : vector<16x64xf32> to vector<16x64xbf16>
    %cst_56 = arith.constant dense<0.000000e+00> : vector<16x32xf32>
    %149 = tpu.matmul %148, %147, %cst_56 {dimension_numbers = #tpu.dot_dimension_numbers<[1], [0], [0], [1], [0, 0, 1, 1], [], []>} : vector<16x64xbf16>, vector<64x32xbf16>, vector<16x32xf32> -> vector<16x32xf32>
    %c0_57 = arith.constant 0 : index
    %c0_58 = arith.constant 0 : index
    %150 = vector.load %arg11[%c0_57, %c0_58] : memref<1x32xf32, #tpu.memory_space<vmem>>, vector<1x32xf32>
    %151 = vector.broadcast %150 : vector<1x32xf32> to vector<16x32xf32>
    %152 = arith.addf %149, %151 : vector<16x32xf32>
    %c0_59 = arith.constant 0 : index
    %c0_60 = arith.constant 0 : index
    %153 = vector.load %arg12[%c0_59, %c0_60] : memref<1x32xf32, #tpu.memory_space<vmem>>, vector<1x32xf32>
    %c0_61 = arith.constant 0 : index
    %c0_62 = arith.constant 0 : index
    %154 = vector.load %arg13[%c0_61, %c0_62] : memref<1x32xf32, #tpu.memory_space<vmem>>, vector<1x32xf32>
    %155 = arith.addf %138, %152 : vector<16x32xf32>
    %cst_63 = arith.constant dense<0.000000e+00> : vector<16xf32>
    %156 = vector.multi_reduction <add>, %155, %cst_63 [1] : vector<16x32xf32> to vector<16xf32>
    %157 = vector.shape_cast %156 : vector<16xf32> to vector<16x1xf32>
    %cst_64 = arith.constant 3.200000e+01 : f32
    %158 = vector.broadcast %cst_64 : f32 to vector<16x1xf32>
    %159 = arith.divf %157, %158 : vector<16x1xf32>
    %160 = vector.broadcast %159 : vector<16x1xf32> to vector<16x32xf32>
    %161 = arith.subf %155, %160 : vector<16x32xf32>
    %162 = arith.mulf %161, %161 : vector<16x32xf32>
    %cst_65 = arith.constant dense<0.000000e+00> : vector<16xf32>
    %163 = vector.multi_reduction <add>, %162, %cst_65 [1] : vector<16x32xf32> to vector<16xf32>
    %164 = vector.shape_cast %163 : vector<16xf32> to vector<16x1xf32>
    %cst_66 = arith.constant 3.200000e+01 : f32
    %165 = vector.broadcast %cst_66 : f32 to vector<16x1xf32>
    %166 = arith.divf %164, %165 : vector<16x1xf32>
    %167 = vector.broadcast %159 : vector<16x1xf32> to vector<16x32xf32>
    %168 = arith.subf %155, %167 : vector<16x32xf32>
    %cst_67 = arith.constant 9.99999974E-6 : f32
    %169 = vector.broadcast %cst_67 : f32 to vector<16x1xf32>
    %170 = arith.addf %166, %169 : vector<16x1xf32>
    %171 = math.rsqrt %170 : vector<16x1xf32>
    %172 = vector.broadcast %171 : vector<16x1xf32> to vector<16x32xf32>
    %173 = arith.mulf %168, %172 : vector<16x32xf32>
    %174 = vector.broadcast %153 : vector<1x32xf32> to vector<16x32xf32>
    %175 = arith.mulf %173, %174 : vector<16x32xf32>
    %176 = vector.broadcast %154 : vector<1x32xf32> to vector<16x32xf32>
    %177 = arith.addf %175, %176 : vector<16x32xf32>
    %178 = vector.shape_cast %177 : vector<16x32xf32> to vector<2x8x32xf32>
    %179 = arith.truncf %178 : vector<2x8x32xf32> to vector<2x8x32xbf16>
    %c0_68 = arith.constant 0 : index
    %c0_69 = arith.constant 0 : index
    %c0_70 = arith.constant 0 : index
    %180 = vector.load %arg14[%c0_68, %c0_69, %c0_70] : memref<2x8x32xbf16, #tpu.memory_space<vmem>>, vector<2x8x32xbf16>
    tpu.vector_store %arg14[%c0_68, %c0_69, %c0_70], %179 {strides = array<i32>} : memref<2x8x32xbf16, #tpu.memory_space<vmem>>, vector<2x8x32xbf16>,
    return
  }
  func.func @transform_0(%arg0: i32) -> (i32, i32, i32) {
    %c0_i32 = arith.constant 0 : i32
    %c0_i32_0 = arith.constant 0 : i32
    %c0_i32_1 = arith.constant 0 : i32
    return %arg0, %c0_i32, %c0_i32_0 : i32, i32, i32
  }
  func.func @transform_1(%arg0: i32) -> (i32, i32) {
    %c0_i32 = arith.constant 0 : i32
    %c0_i32_0 = arith.constant 0 : i32
    %c0_i32_1 = arith.constant 0 : i32
    return %c0_i32, %c0_i32_0 : i32, i32
  }
  func.func @transform_2(%arg0: i32) -> (i32, i32) {
    %c0_i32 = arith.constant 0 : i32
    %c0_i32_0 = arith.constant 0 : i32
    %c0_i32_1 = arith.constant 0 : i32
    return %c0_i32, %c0_i32_0 : i32, i32
  }
  func.func @transform_3(%arg0: i32) -> (i32, i32) {
    %c0_i32 = arith.constant 0 : i32
    %c0_i32_0 = arith.constant 0 : i32
    %c0_i32_1 = arith.constant 0 : i32
    return %c0_i32, %c0_i32_0 : i32, i32
  }
  func.func @transform_4(%arg0: i32) -> (i32, i32) {
    %c0_i32 = arith.constant 0 : i32
    %c0_i32_0 = arith.constant 0 : i32
    %c0_i32_1 = arith.constant 0 : i32
    return %c0_i32, %c0_i32_0 : i32, i32
  }
  func.func @transform_5(%arg0: i32) -> (i32, i32) {
    %c0_i32 = arith.constant 0 : i32
    %c0_i32_0 = arith.constant 0 : i32
    %c0_i32_1 = arith.constant 0 : i32
    return %c0_i32, %c0_i32_0 : i32, i32
  }
  func.func @transform_6(%arg0: i32) -> (i32, i32) {
    %c0_i32 = arith.constant 0 : i32
    %c0_i32_0 = arith.constant 0 : i32
    %c0_i32_1 = arith.constant 0 : i32
    return %c0_i32, %c0_i32_0 : i32, i32
  }
  func.func @transform_7(%arg0: i32) -> (i32, i32) {
    %c0_i32 = arith.constant 0 : i32
    %c0_i32_0 = arith.constant 0 : i32
    %c0_i32_1 = arith.constant 0 : i32
    return %c0_i32, %c0_i32_0 : i32, i32
  }
  func.func @transform_8(%arg0: i32) -> (i32, i32) {
    %c0_i32 = arith.constant 0 : i32
    %c0_i32_0 = arith.constant 0 : i32
    %c0_i32_1 = arith.constant 0 : i32
    return %c0_i32, %c0_i32_0 : i32, i32
  }
  func.func @transform_9(%arg0: i32) -> (i32, i32) {
    %c0_i32 = arith.constant 0 : i32
    %c0_i32_0 = arith.constant 0 : i32
    %c0_i32_1 = arith.constant 0 : i32
    return %c0_i32, %c0_i32_0 : i32, i32
  }
  func.func @transform_10(%arg0: i32) -> (i32, i32) {
    %c0_i32 = arith.constant 0 : i32
    %c0_i32_0 = arith.constant 0 : i32
    %c0_i32_1 = arith.constant 0 : i32
    return %c0_i32, %c0_i32_0 : i32, i32
  }
  func.func @transform_11(%arg0: i32) -> (i32, i32) {
    %c0_i32 = arith.constant 0 : i32
    %c0_i32_0 = arith.constant 0 : i32
    %c0_i32_1 = arith.constant 0 : i32
    return %c0_i32, %c0_i32_0 : i32, i32
  }
  func.func @transform_12(%arg0: i32) -> (i32, i32) {
    %c0_i32 = arith.constant 0 : i32
    %c0_i32_0 = arith.constant 0 : i32
    %c0_i32_1 = arith.constant 0 : i32
    return %c0_i32, %c0_i32_0 : i32, i32
  }
  func.func @transform_13(%arg0: i32) -> (i32, i32, i32) {
    %c0_i32 = arith.constant 0 : i32
    %c0_i32_0 = arith.constant 0 : i32
    %c0_i32_1 = arith.constant 0 : i32
    return %arg0, %c0_i32, %c0_i32_0 : i32, i32, i32
  }
  func.func @transform_14(%arg0: i32) -> (i32, i32, i32) {
    %c0_i32 = arith.constant 0 : i32
    %c0_i32_0 = arith.constant 0 : i32
    %c0_i32_1 = arith.constant 0 : i32
    return %arg0, %c0_i32, %c0_i32_0 : i32, i32, i32
  }
}

module attributes {stable_mosaic.version = 11 : i64} {
  func.func @_encoder_layer_kernel(%arg0: i32, %arg1: memref<2x8x32xbf16, #tpu.memory_space<vmem>>, %arg2: memref<32x96xbf16, #tpu.memory_space<vmem>>, %arg3: memref<1x96xf32, #tpu.memory_space<vmem>>, %arg4: memref<32x32xbf16, #tpu.memory_space<vmem>>, %arg5: memref<1x32xf32, #tpu.memory_space<vmem>>, %arg6: memref<1x32xf32, #tpu.memory_space<vmem>>, %arg7: memref<1x32xf32, #tpu.memory_space<vmem>>, %arg8: memref<32x64xbf16, #tpu.memory_space<vmem>>, %arg9: memref<1x64xf32, #tpu.memory_space<vmem>>, %arg10: memref<64x32xbf16, #tpu.memory_space<vmem>>, %arg11: memref<1x32xf32, #tpu.memory_space<vmem>>, %arg12: memref<1x32xf32, #tpu.memory_space<vmem>>, %arg13: memref<1x32xf32, #tpu.memory_space<vmem>>, %arg14: memref<2x8x32xbf16, #tpu.memory_space<vmem>>, %arg15: memref<2x8x8xf32, #tpu.memory_space<vmem>>) attributes {dimension_semantics = [#tpu.dimension_semantics<parallel>], iteration_bounds = array<i64: 1>, scalar_prefetch = 0 : i64, scratch_operands = 0 : i64, tpu.core_type = #tpu.core_type<tc>, window_params = [{transform_indices = @transform_0, window_bounds = array<i64: 2, 8, 32>}, {pipeline_mode = #tpu.pipeline_mode<synchronous>, transform_indices = @transform_1, window_bounds = array<i64: 32, 96>}, {pipeline_mode = #tpu.pipeline_mode<synchronous>, transform_indices = @transform_2, window_bounds = array<i64: 1, 96>}, {pipeline_mode = #tpu.pipeline_mode<synchronous>, transform_indices = @transform_3, window_bounds = array<i64: 32, 32>}, {pipeline_mode = #tpu.pipeline_mode<synchronous>, transform_indices = @transform_4, window_bounds = array<i64: 1, 32>}, {pipeline_mode = #tpu.pipeline_mode<synchronous>, transform_indices = @transform_5, window_bounds = array<i64: 1, 32>}, {pipeline_mode = #tpu.pipeline_mode<synchronous>, transform_indices = @transform_6, window_bounds = array<i64: 1, 32>}, {pipeline_mode = #tpu.pipeline_mode<synchronous>, transform_indices = @transform_7, window_bounds = array<i64: 32, 64>}, {pipeline_mode = #tpu.pipeline_mode<synchronous>, transform_indices = @transform_8, window_bounds = array<i64: 1, 64>}, {pipeline_mode = #tpu.pipeline_mode<synchronous>, transform_indices = @transform_9, window_bounds = array<i64: 64, 32>}, {pipeline_mode = #tpu.pipeline_mode<synchronous>, transform_indices = @transform_10, window_bounds = array<i64: 1, 32>}, {pipeline_mode = #tpu.pipeline_mode<synchronous>, transform_indices = @transform_11, window_bounds = array<i64: 1, 32>}, {pipeline_mode = #tpu.pipeline_mode<synchronous>, transform_indices = @transform_12, window_bounds = array<i64: 1, 32>}, {transform_indices = @transform_13, window_bounds = array<i64: 2, 8, 32>}, {transform_indices = @transform_14, window_bounds = array<i64: 2, 8, 8>}]} {
    %c0 = arith.constant 0 : index
    %c0_0 = arith.constant 0 : index
    %c0_1 = arith.constant 0 : index
    %0 = vector.load %arg1[%c0, %c0_0, %c0_1] : memref<2x8x32xbf16, #tpu.memory_space<vmem>>, vector<2x8x32xbf16>
    %1 = arith.extf %0 : vector<2x8x32xbf16> to vector<2x8x32xf32>
    %2 = vector.shape_cast %1 : vector<2x8x32xf32> to vector<16x32xf32>
    %c0_2 = arith.constant 0 : index
    %c0_3 = arith.constant 0 : index
    %3 = vector.load %arg2[%c0_2, %c0_3] : memref<32x96xbf16, #tpu.memory_space<vmem>>, vector<32x96xbf16>
    %4 = arith.truncf %2 : vector<16x32xf32> to vector<16x32xbf16>
    %cst = arith.constant dense<0.000000e+00> : vector<16x96xf32>
    %5 = tpu.matmul %4, %3, %cst {dimension_numbers = #tpu.dot_dimension_numbers<[1], [0], [0], [1], [0, 0, 1, 1], [], []>} : vector<16x32xbf16>, vector<32x96xbf16>, vector<16x96xf32> -> vector<16x96xf32>
    %c0_4 = arith.constant 0 : index
    %c0_5 = arith.constant 0 : index
    %6 = vector.load %arg3[%c0_4, %c0_5] : memref<1x96xf32, #tpu.memory_space<vmem>>, vector<1x96xf32>
    %7 = vector.broadcast %6 : vector<1x96xf32> to vector<16x96xf32>
    %8 = arith.addf %5, %7 : vector<16x96xf32>
    %9 = vector.shape_cast %8 : vector<16x96xf32> to vector<2x8x96xf32>
    %cst_6 = arith.constant 0.000000e+00 : f32
    %10 = vector.broadcast %cst_6 : f32 to vector<2x8x8xf32>
    %cst_7 = arith.constant 0.000000e+00 : f32
    %11 = vector.broadcast %cst_7 : f32 to vector<16x32xf32>
    %12 = vector.extract_strided_slice %9 {offsets = [0, 0, 0], sizes = [2, 8, 8], strides = [1, 1, 1]} : vector<2x8x96xf32> to vector<2x8x8xf32>
    %13 = vector.extract_strided_slice %9 {offsets = [0, 0, 32], sizes = [2, 8, 8], strides = [1, 1, 1]} : vector<2x8x96xf32> to vector<2x8x8xf32>
    %14 = vector.extract_strided_slice %9 {offsets = [0, 0, 64], sizes = [2, 8, 8], strides = [1, 1, 1]} : vector<2x8x96xf32> to vector<2x8x8xf32>
    %15 = arith.truncf %12 : vector<2x8x8xf32> to vector<2x8x8xbf16>
    %16 = arith.truncf %13 : vector<2x8x8xf32> to vector<2x8x8xbf16>
    "tpu.trace_start"() <{level = 10 : i32, message = "bqd,bkd->bqk"}> : () -> ()
    %cst_8 = arith.constant dense<0.000000e+00> : vector<2x8x8xf32>
    %17 = tpu.matmul %15, %16, %cst_8 {dimension_numbers = #tpu.dot_dimension_numbers<[2], [2], [1], [1], [0, 0, 0, 1, 1, 1], [0], [0]>} : vector<2x8x8xbf16>, vector<2x8x8xbf16>, vector<2x8x8xf32> -> vector<2x8x8xf32>
    "tpu.trace_stop"() : () -> ()
    %cst_9 = arith.constant dense<0xFF800000> : vector<2x8xf32>
    %18 = vector.multi_reduction <maximumf>, %17, %cst_9 [2] : vector<2x8x8xf32> to vector<2x8xf32>
    %19 = vector.shape_cast %18 : vector<2x8xf32> to vector<2x8x1xf32>
    %20 = vector.broadcast %19 : vector<2x8x1xf32> to vector<2x8x8xf32>
    %21 = arith.subf %17, %20 : vector<2x8x8xf32>
    %22 = math.exp %21 : vector<2x8x8xf32>
    %cst_10 = arith.constant dense<0.000000e+00> : vector<2x8xf32>
    %23 = vector.multi_reduction <add>, %22, %cst_10 [2] : vector<2x8x8xf32> to vector<2x8xf32>
    %24 = vector.shape_cast %23 : vector<2x8xf32> to vector<2x8x1xf32>
    %25 = vector.broadcast %24 : vector<2x8x1xf32> to vector<2x8x8xf32>
    %26 = arith.divf %22, %25 : vector<2x8x8xf32>
    %27 = arith.addf %10, %26 : vector<2x8x8xf32>
    %28 = arith.truncf %26 : vector<2x8x8xf32> to vector<2x8x8xbf16>
    %29 = arith.truncf %14 : vector<2x8x8xf32> to vector<2x8x8xbf16>
    "tpu.trace_start"() <{level = 10 : i32, message = "bqk,bkd->bqd"}> : () -> ()
    %cst_11 = arith.constant dense<0.000000e+00> : vector<2x8x8xf32>
    %30 = tpu.matmul %28, %29, %cst_11 {dimension_numbers = #tpu.dot_dimension_numbers<[2], [1], [1], [2], [0, 0, 0, 1, 1, 2], [0], [0]>} : vector<2x8x8xbf16>, vector<2x8x8xbf16>, vector<2x8x8xf32> -> vector<2x8x8xf32>
    "tpu.trace_stop"() : () -> ()
    %31 = vector.shape_cast %30 : vector<2x8x8xf32> to vector<16x8xf32>
    %c0_12 = arith.constant 0 : index
    %c0_13 = arith.constant 0 : index
    %32 = vector.load %arg4[%c0_12, %c0_13] : memref<32x32xbf16, #tpu.memory_space<vmem>>, vector<8x32xbf16>
    %33 = arith.truncf %31 : vector<16x8xf32> to vector<16x8xbf16>
    %cst_14 = arith.constant dense<0.000000e+00> : vector<16x32xf32>
    %34 = tpu.matmul %33, %32, %cst_14 {dimension_numbers = #tpu.dot_dimension_numbers<[1], [0], [0], [1], [0, 0, 1, 1], [], []>} : vector<16x8xbf16>, vector<8x32xbf16>, vector<16x32xf32> -> vector<16x32xf32>
    %35 = arith.addf %11, %34 : vector<16x32xf32>
    %36 = vector.extract_strided_slice %9 {offsets = [0, 0, 8], sizes = [2, 8, 8], strides = [1, 1, 1]} : vector<2x8x96xf32> to vector<2x8x8xf32>
    %37 = vector.extract_strided_slice %9 {offsets = [0, 0, 40], sizes = [2, 8, 8], strides = [1, 1, 1]} : vector<2x8x96xf32> to vector<2x8x8xf32>
    %38 = vector.extract_strided_slice %9 {offsets = [0, 0, 72], sizes = [2, 8, 8], strides = [1, 1, 1]} : vector<2x8x96xf32> to vector<2x8x8xf32>
    %39 = arith.truncf %36 : vector<2x8x8xf32> to vector<2x8x8xbf16>
    %40 = arith.truncf %37 : vector<2x8x8xf32> to vector<2x8x8xbf16>
    "tpu.trace_start"() <{level = 10 : i32, message = "bqd,bkd->bqk"}> : () -> ()
    %cst_15 = arith.constant dense<0.000000e+00> : vector<2x8x8xf32>
    %41 = tpu.matmul %39, %40, %cst_15 {dimension_numbers = #tpu.dot_dimension_numbers<[2], [2], [1], [1], [0, 0, 0, 1, 1, 1], [0], [0]>} : vector<2x8x8xbf16>, vector<2x8x8xbf16>, vector<2x8x8xf32> -> vector<2x8x8xf32>
    "tpu.trace_stop"() : () -> ()
    %cst_16 = arith.constant dense<0xFF800000> : vector<2x8xf32>
    %42 = vector.multi_reduction <maximumf>, %41, %cst_16 [2] : vector<2x8x8xf32> to vector<2x8xf32>
    %43 = vector.shape_cast %42 : vector<2x8xf32> to vector<2x8x1xf32>
    %44 = vector.broadcast %43 : vector<2x8x1xf32> to vector<2x8x8xf32>
    %45 = arith.subf %41, %44 : vector<2x8x8xf32>
    %46 = math.exp %45 : vector<2x8x8xf32>
    %cst_17 = arith.constant dense<0.000000e+00> : vector<2x8xf32>
    %47 = vector.multi_reduction <add>, %46, %cst_17 [2] : vector<2x8x8xf32> to vector<2x8xf32>
    %48 = vector.shape_cast %47 : vector<2x8xf32> to vector<2x8x1xf32>
    %49 = vector.broadcast %48 : vector<2x8x1xf32> to vector<2x8x8xf32>
    %50 = arith.divf %46, %49 : vector<2x8x8xf32>
    %51 = arith.addf %27, %50 : vector<2x8x8xf32>
    %52 = arith.truncf %50 : vector<2x8x8xf32> to vector<2x8x8xbf16>
    %53 = arith.truncf %38 : vector<2x8x8xf32> to vector<2x8x8xbf16>
    "tpu.trace_start"() <{level = 10 : i32, message = "bqk,bkd->bqd"}> : () -> ()
    %cst_18 = arith.constant dense<0.000000e+00> : vector<2x8x8xf32>
    %54 = tpu.matmul %52, %53, %cst_18 {dimension_numbers = #tpu.dot_dimension_numbers<[2], [1], [1], [2], [0, 0, 0, 1, 1, 2], [0], [0]>} : vector<2x8x8xbf16>, vector<2x8x8xbf16>, vector<2x8x8xf32> -> vector<2x8x8xf32>
    "tpu.trace_stop"() : () -> ()
    %55 = vector.shape_cast %54 : vector<2x8x8xf32> to vector<16x8xf32>
    %c8 = arith.constant 8 : index
    %c0_19 = arith.constant 0 : index
    %56 = vector.load %arg4[%c8, %c0_19] : memref<32x32xbf16, #tpu.memory_space<vmem>>, vector<8x32xbf16>
    %57 = arith.truncf %55 : vector<16x8xf32> to vector<16x8xbf16>
    %cst_20 = arith.constant dense<0.000000e+00> : vector<16x32xf32>
    %58 = tpu.matmul %57, %56, %cst_20 {dimension_numbers = #tpu.dot_dimension_numbers<[1], [0], [0], [1], [0, 0, 1, 1], [], []>} : vector<16x8xbf16>, vector<8x32xbf16>, vector<16x32xf32> -> vector<16x32xf32>
    %59 = arith.addf %35, %58 : vector<16x32xf32>
    %60 = vector.extract_strided_slice %9 {offsets = [0, 0, 16], sizes = [2, 8, 8], strides = [1, 1, 1]} : vector<2x8x96xf32> to vector<2x8x8xf32>
    %61 = vector.extract_strided_slice %9 {offsets = [0, 0, 48], sizes = [2, 8, 8], strides = [1, 1, 1]} : vector<2x8x96xf32> to vector<2x8x8xf32>
    %62 = vector.extract_strided_slice %9 {offsets = [0, 0, 80], sizes = [2, 8, 8], strides = [1, 1, 1]} : vector<2x8x96xf32> to vector<2x8x8xf32>
    %63 = arith.truncf %60 : vector<2x8x8xf32> to vector<2x8x8xbf16>
    %64 = arith.truncf %61 : vector<2x8x8xf32> to vector<2x8x8xbf16>
    "tpu.trace_start"() <{level = 10 : i32, message = "bqd,bkd->bqk"}> : () -> ()
    %cst_21 = arith.constant dense<0.000000e+00> : vector<2x8x8xf32>
    %65 = tpu.matmul %63, %64, %cst_21 {dimension_numbers = #tpu.dot_dimension_numbers<[2], [2], [1], [1], [0, 0, 0, 1, 1, 1], [0], [0]>} : vector<2x8x8xbf16>, vector<2x8x8xbf16>, vector<2x8x8xf32> -> vector<2x8x8xf32>
    "tpu.trace_stop"() : () -> ()
    %cst_22 = arith.constant dense<0xFF800000> : vector<2x8xf32>
    %66 = vector.multi_reduction <maximumf>, %65, %cst_22 [2] : vector<2x8x8xf32> to vector<2x8xf32>
    %67 = vector.shape_cast %66 : vector<2x8xf32> to vector<2x8x1xf32>
    %68 = vector.broadcast %67 : vector<2x8x1xf32> to vector<2x8x8xf32>
    %69 = arith.subf %65, %68 : vector<2x8x8xf32>
    %70 = math.exp %69 : vector<2x8x8xf32>
    %cst_23 = arith.constant dense<0.000000e+00> : vector<2x8xf32>
    %71 = vector.multi_reduction <add>, %70, %cst_23 [2] : vector<2x8x8xf32> to vector<2x8xf32>
    %72 = vector.shape_cast %71 : vector<2x8xf32> to vector<2x8x1xf32>
    %73 = vector.broadcast %72 : vector<2x8x1xf32> to vector<2x8x8xf32>
    %74 = arith.divf %70, %73 : vector<2x8x8xf32>
    %75 = arith.addf %51, %74 : vector<2x8x8xf32>
    %76 = arith.truncf %74 : vector<2x8x8xf32> to vector<2x8x8xbf16>
    %77 = arith.truncf %62 : vector<2x8x8xf32> to vector<2x8x8xbf16>
    "tpu.trace_start"() <{level = 10 : i32, message = "bqk,bkd->bqd"}> : () -> ()
    %cst_24 = arith.constant dense<0.000000e+00> : vector<2x8x8xf32>
    %78 = tpu.matmul %76, %77, %cst_24 {dimension_numbers = #tpu.dot_dimension_numbers<[2], [1], [1], [2], [0, 0, 0, 1, 1, 2], [0], [0]>} : vector<2x8x8xbf16>, vector<2x8x8xbf16>, vector<2x8x8xf32> -> vector<2x8x8xf32>
    "tpu.trace_stop"() : () -> ()
    %79 = vector.shape_cast %78 : vector<2x8x8xf32> to vector<16x8xf32>
    %c16 = arith.constant 16 : index
    %c0_25 = arith.constant 0 : index
    %80 = vector.load %arg4[%c16, %c0_25] : memref<32x32xbf16, #tpu.memory_space<vmem>>, vector<8x32xbf16>
    %81 = arith.truncf %79 : vector<16x8xf32> to vector<16x8xbf16>
    %cst_26 = arith.constant dense<0.000000e+00> : vector<16x32xf32>
    %82 = tpu.matmul %81, %80, %cst_26 {dimension_numbers = #tpu.dot_dimension_numbers<[1], [0], [0], [1], [0, 0, 1, 1], [], []>} : vector<16x8xbf16>, vector<8x32xbf16>, vector<16x32xf32> -> vector<16x32xf32>
    %83 = arith.addf %59, %82 : vector<16x32xf32>
    %84 = vector.extract_strided_slice %9 {offsets = [0, 0, 24], sizes = [2, 8, 8], strides = [1, 1, 1]} : vector<2x8x96xf32> to vector<2x8x8xf32>
    %85 = vector.extract_strided_slice %9 {offsets = [0, 0, 56], sizes = [2, 8, 8], strides = [1, 1, 1]} : vector<2x8x96xf32> to vector<2x8x8xf32>
    %86 = vector.extract_strided_slice %9 {offsets = [0, 0, 88], sizes = [2, 8, 8], strides = [1, 1, 1]} : vector<2x8x96xf32> to vector<2x8x8xf32>
    %87 = arith.truncf %84 : vector<2x8x8xf32> to vector<2x8x8xbf16>
    %88 = arith.truncf %85 : vector<2x8x8xf32> to vector<2x8x8xbf16>
    "tpu.trace_start"() <{level = 10 : i32, message = "bqd,bkd->bqk"}> : () -> ()
    %cst_27 = arith.constant dense<0.000000e+00> : vector<2x8x8xf32>
    %89 = tpu.matmul %87, %88, %cst_27 {dimension_numbers = #tpu.dot_dimension_numbers<[2], [2], [1], [1], [0, 0, 0, 1, 1, 1], [0], [0]>} : vector<2x8x8xbf16>, vector<2x8x8xbf16>, vector<2x8x8xf32> -> vector<2x8x8xf32>
    "tpu.trace_stop"() : () -> ()
    %cst_28 = arith.constant dense<0xFF800000> : vector<2x8xf32>
    %90 = vector.multi_reduction <maximumf>, %89, %cst_28 [2] : vector<2x8x8xf32> to vector<2x8xf32>
    %91 = vector.shape_cast %90 : vector<2x8xf32> to vector<2x8x1xf32>
    %92 = vector.broadcast %91 : vector<2x8x1xf32> to vector<2x8x8xf32>
    %93 = arith.subf %89, %92 : vector<2x8x8xf32>
    %94 = math.exp %93 : vector<2x8x8xf32>
    %cst_29 = arith.constant dense<0.000000e+00> : vector<2x8xf32>
    %95 = vector.multi_reduction <add>, %94, %cst_29 [2] : vector<2x8x8xf32> to vector<2x8xf32>
    %96 = vector.shape_cast %95 : vector<2x8xf32> to vector<2x8x1xf32>
    %97 = vector.broadcast %96 : vector<2x8x1xf32> to vector<2x8x8xf32>
    %98 = arith.divf %94, %97 : vector<2x8x8xf32>
    %99 = arith.addf %75, %98 : vector<2x8x8xf32>
    %100 = arith.truncf %98 : vector<2x8x8xf32> to vector<2x8x8xbf16>
    %101 = arith.truncf %86 : vector<2x8x8xf32> to vector<2x8x8xbf16>
    "tpu.trace_start"() <{level = 10 : i32, message = "bqk,bkd->bqd"}> : () -> ()
    %cst_30 = arith.constant dense<0.000000e+00> : vector<2x8x8xf32>
    %102 = tpu.matmul %100, %101, %cst_30 {dimension_numbers = #tpu.dot_dimension_numbers<[2], [1], [1], [2], [0, 0, 0, 1, 1, 2], [0], [0]>} : vector<2x8x8xbf16>, vector<2x8x8xbf16>, vector<2x8x8xf32> -> vector<2x8x8xf32>
    "tpu.trace_stop"() : () -> ()
    %103 = vector.shape_cast %102 : vector<2x8x8xf32> to vector<16x8xf32>
    %c24 = arith.constant 24 : index
    %c0_31 = arith.constant 0 : index
    %104 = vector.load %arg4[%c24, %c0_31] : memref<32x32xbf16, #tpu.memory_space<vmem>>, vector<8x32xbf16>
    %105 = arith.truncf %103 : vector<16x8xf32> to vector<16x8xbf16>
    %cst_32 = arith.constant dense<0.000000e+00> : vector<16x32xf32>
    %106 = tpu.matmul %105, %104, %cst_32 {dimension_numbers = #tpu.dot_dimension_numbers<[1], [0], [0], [1], [0, 0, 1, 1], [], []>} : vector<16x8xbf16>, vector<8x32xbf16>, vector<16x32xf32> -> vector<16x32xf32>
    %107 = arith.addf %83, %106 : vector<16x32xf32>
    %cst_33 = arith.constant 2.500000e-01 : f32
    %108 = vector.broadcast %cst_33 : f32 to vector<2x8x8xf32>
    %109 = arith.mulf %99, %108 : vector<2x8x8xf32>
    %c0_34 = arith.constant 0 : index
    %c0_35 = arith.constant 0 : index
    %c0_36 = arith.constant 0 : index
    %110 = vector.load %arg15[%c0_34, %c0_35, %c0_36] : memref<2x8x8xf32, #tpu.memory_space<vmem>>, vector<2x8x8xf32>
    tpu.vector_store %arg15[%c0_34, %c0_35, %c0_36], %109 {strides = array<i32>} : memref<2x8x8xf32, #tpu.memory_space<vmem>>, vector<2x8x8xf32>,
    %c0_37 = arith.constant 0 : index
    %c0_38 = arith.constant 0 : index
    %111 = vector.load %arg5[%c0_37, %c0_38] : memref<1x32xf32, #tpu.memory_space<vmem>>, vector<1x32xf32>
    %112 = vector.broadcast %111 : vector<1x32xf32> to vector<16x32xf32>
    %113 = arith.addf %107, %112 : vector<16x32xf32>
    %c0_39 = arith.constant 0 : index
    %c0_40 = arith.constant 0 : index
    %114 = vector.load %arg6[%c0_39, %c0_40] : memref<1x32xf32, #tpu.memory_space<vmem>>, vector<1x32xf32>
    %c0_41 = arith.constant 0 : index
    %c0_42 = arith.constant 0 : index
    %115 = vector.load %arg7[%c0_41, %c0_42] : memref<1x32xf32, #tpu.memory_space<vmem>>, vector<1x32xf32>
    %116 = arith.addf %2, %113 : vector<16x32xf32>
    %cst_43 = arith.constant dense<0.000000e+00> : vector<16xf32>
    %117 = vector.multi_reduction <add>, %116, %cst_43 [1] : vector<16x32xf32> to vector<16xf32>
    %118 = vector.shape_cast %117 : vector<16xf32> to vector<16x1xf32>
    %cst_44 = arith.constant 3.200000e+01 : f32
    %119 = vector.broadcast %cst_44 : f32 to vector<16x1xf32>
    %120 = arith.divf %118, %119 : vector<16x1xf32>
    %121 = vector.broadcast %120 : vector<16x1xf32> to vector<16x32xf32>
    %122 = arith.subf %116, %121 : vector<16x32xf32>
    %123 = arith.mulf %122, %122 : vector<16x32xf32>
    %cst_45 = arith.constant dense<0.000000e+00> : vector<16xf32>
    %124 = vector.multi_reduction <add>, %123, %cst_45 [1] : vector<16x32xf32> to vector<16xf32>
    %125 = vector.shape_cast %124 : vector<16xf32> to vector<16x1xf32>
    %cst_46 = arith.constant 3.200000e+01 : f32
    %126 = vector.broadcast %cst_46 : f32 to vector<16x1xf32>
    %127 = arith.divf %125, %126 : vector<16x1xf32>
    %128 = vector.broadcast %120 : vector<16x1xf32> to vector<16x32xf32>
    %129 = arith.subf %116, %128 : vector<16x32xf32>
    %cst_47 = arith.constant 9.99999974E-6 : f32
    %130 = vector.broadcast %cst_47 : f32 to vector<16x1xf32>
    %131 = arith.addf %127, %130 : vector<16x1xf32>
    %132 = math.rsqrt %131 : vector<16x1xf32>
    %133 = vector.broadcast %132 : vector<16x1xf32> to vector<16x32xf32>
    %134 = arith.mulf %129, %133 : vector<16x32xf32>
    %135 = vector.broadcast %114 : vector<1x32xf32> to vector<16x32xf32>
    %136 = arith.mulf %134, %135 : vector<16x32xf32>
    %137 = vector.broadcast %115 : vector<1x32xf32> to vector<16x32xf32>
    %138 = arith.addf %136, %137 : vector<16x32xf32>
    %c0_48 = arith.constant 0 : index
    %c0_49 = arith.constant 0 : index
    %139 = vector.load %arg8[%c0_48, %c0_49] : memref<32x64xbf16, #tpu.memory_space<vmem>>, vector<32x64xbf16>
    %140 = arith.truncf %138 : vector<16x32xf32> to vector<16x32xbf16>
    %cst_50 = arith.constant dense<0.000000e+00> : vector<16x64xf32>
    %141 = tpu.matmul %140, %139, %cst_50 {dimension_numbers = #tpu.dot_dimension_numbers<[1], [0], [0], [1], [0, 0, 1, 1], [], []>} : vector<16x32xbf16>, vector<32x64xbf16>, vector<16x64xf32> -> vector<16x64xf32>
    %c0_51 = arith.constant 0 : index
    %c0_52 = arith.constant 0 : index
    %142 = vector.load %arg9[%c0_51, %c0_52] : memref<1x64xf32, #tpu.memory_space<vmem>>, vector<1x64xf32>
    %143 = vector.broadcast %142 : vector<1x64xf32> to vector<16x64xf32>
    %144 = arith.addf %141, %143 : vector<16x64xf32>
    %cst_53 = arith.constant 0.000000e+00 : f32
    %145 = vector.broadcast %cst_53 : f32 to vector<16x64xf32>
    %146 = arith.maximumf %144, %145 : vector<16x64xf32>
    %c0_54 = arith.constant 0 : index
    %c0_55 = arith.constant 0 : index
    %147 = vector.load %arg10[%c0_54, %c0_55] : memref<64x32xbf16, #tpu.memory_space<vmem>>, vector<64x32xbf16>
    %148 = arith.truncf %146 : vector<16x64xf32> to vector<16x64xbf16>
    %cst_56 = arith.constant dense<0.000000e+00> : vector<16x32xf32>
    %149 = tpu.matmul %148, %147, %cst_56 {dimension_numbers = #tpu.dot_dimension_numbers<[1], [0], [0], [1], [0, 0, 1, 1], [], []>} : vector<16x64xbf16>, vector<64x32xbf16>, vector<16x32xf32> -> vector<16x32xf32>
    %c0_57 = arith.constant 0 : index
    %c0_58 = arith.constant 0 : index
    %150 = vector.load %arg11[%c0_57, %c0_58] : memref<1x32xf32, #tpu.memory_space<vmem>>, vector<1x32xf32>
    %151 = vector.broadcast %150 : vector<1x32xf32> to vector<16x32xf32>
    %152 = arith.addf %149, %151 : vector<16x32xf32>
    %c0_59 = arith.constant 0 : index
    %c0_60 = arith.constant 0 : index
    %153 = vector.load %arg12[%c0_59, %c0_60] : memref<1x32xf32, #tpu.memory_space<vmem>>, vector<1x32xf32>
    %c0_61 = arith.constant 0 : index
    %c0_62 = arith.constant 0 : index
    %154 = vector.load %arg13[%c0_61, %c0_62] : memref<1x32xf32, #tpu.memory_space<vmem>>, vector<1x32xf32>
    %155 = arith.addf %138, %152 : vector<16x32xf32>
    %cst_63 = arith.constant dense<0.000000e+00> : vector<16xf32>
    %156 = vector.multi_reduction <add>, %155, %cst_63 [1] : vector<16x32xf32> to vector<16xf32>
    %157 = vector.shape_cast %156 : vector<16xf32> to vector<16x1xf32>
    %cst_64 = arith.constant 3.200000e+01 : f32
    %158 = vector.broadcast %cst_64 : f32 to vector<16x1xf32>
    %159 = arith.divf %157, %158 : vector<16x1xf32>
    %160 = vector.broadcast %159 : vector<16x1xf32> to vector<16x32xf32>
    %161 = arith.subf %155, %160 : vector<16x32xf32>
    %162 = arith.mulf %161, %161 : vector<16x32xf32>
    %cst_65 = arith.constant dense<0.000000e+00> : vector<16xf32>
    %163 = vector.multi_reduction <add>, %162, %cst_65 [1] : vector<16x32xf32> to vector<16xf32>
    %164 = vector.shape_cast %163 : vector<16xf32> to vector<16x1xf32>
    %cst_66 = arith.constant 3.200000e+01 : f32
    %165 = vector.broadcast %cst_66 : f32 to vector<16x1xf32>
    %166 = arith.divf %164, %165 : vector<16x1xf32>
    %167 = vector.broadcast %159 : vector<16x1xf32> to vector<16x32xf32>
    %168 = arith.subf %155, %167 : vector<16x32xf32>
    %cst_67 = arith.constant 9.99999974E-6 : f32
    %169 = vector.broadcast %cst_67 : f32 to vector<16x1xf32>
    %170 = arith.addf %166, %169 : vector<16x1xf32>
    %171 = math.rsqrt %170 : vector<16x1xf32>
    %172 = vector.broadcast %171 : vector<16x1xf32> to vector<16x32xf32>
    %173 = arith.mulf %168, %172 : vector<16x32xf32>
    %174 = vector.broadcast %153 : vector<1x32xf32> to vector<16x32xf32>
    %175 = arith.mulf %173, %174 : vector<16x32xf32>
    %176 = vector.broadcast %154 : vector<1x32xf32> to vector<16x32xf32>
    %177 = arith.addf %175, %176 : vector<16x32xf32>
    %178 = vector.shape_cast %177 : vector<16x32xf32> to vector<2x8x32xf32>
    %179 = arith.truncf %178 : vector<2x8x32xf32> to vector<2x8x32xbf16>
    %c0_68 = arith.constant 0 : index
    %c0_69 = arith.constant 0 : index
    %c0_70 = arith.constant 0 : index
    %180 = vector.load %arg14[%c0_68, %c0_69, %c0_70] : memref<2x8x32xbf16, #tpu.memory_space<vmem>>, vector<2x8x32xbf16>
    tpu.vector_store %arg14[%c0_68, %c0_69, %c0_70], %179 {strides = array<i32>} : memref<2x8x32xbf16, #tpu.memory_space<vmem>>, vector<2x8x32xbf16>,
    return
  }
  func.func @transform_0(%arg0: i32) -> (i32, i32, i32) {
    %c0_i32 = arith.constant 0 : i32
    %c0_i32_0 = arith.constant 0 : i32
    %c0_i32_1 = arith.constant 0 : i32
    return %arg0, %c0_i32, %c0_i32_0 : i32, i32, i32
  }
  func.func @transform_1(%arg0: i32) -> (i32, i32) {
    %c0_i32 = arith.constant 0 : i32
    %c0_i32_0 = arith.constant 0 : i32
    %c0_i32_1 = arith.constant 0 : i32
    return %c0_i32, %c0_i32_0 : i32, i32
  }
  func.func @transform_2(%arg0: i32) -> (i32, i32) {
    %c0_i32 = arith.constant 0 : i32
    %c0_i32_0 = arith.constant 0 : i32
    %c0_i32_1 = arith.constant 0 : i32
    return %c0_i32, %c0_i32_0 : i32, i32
  }
  func.func @transform_3(%arg0: i32) -> (i32, i32) {
    %c0_i32 = arith.constant 0 : i32
    %c0_i32_0 = arith.constant 0 : i32
    %c0_i32_1 = arith.constant 0 : i32
    return %c0_i32, %c0_i32_0 : i32, i32
  }
  func.func @transform_4(%arg0: i32) -> (i32, i32) {
    %c0_i32 = arith.constant 0 : i32
    %c0_i32_0 = arith.constant 0 : i32
    %c0_i32_1 = arith.constant 0 : i32
    return %c0_i32, %c0_i32_0 : i32, i32
  }
  func.func @transform_5(%arg0: i32) -> (i32, i32) {
    %c0_i32 = arith.constant 0 : i32
    %c0_i32_0 = arith.constant 0 : i32
    %c0_i32_1 = arith.constant 0 : i32
    return %c0_i32, %c0_i32_0 : i32, i32
  }
  func.func @transform_6(%arg0: i32) -> (i32, i32) {
    %c0_i32 = arith.constant 0 : i32
    %c0_i32_0 = arith.constant 0 : i32
    %c0_i32_1 = arith.constant 0 : i32
    return %c0_i32, %c0_i32_0 : i32, i32
  }
  func.func @transform_7(%arg0: i32) -> (i32, i32) {
    %c0_i32 = arith.constant 0 : i32
    %c0_i32_0 = arith.constant 0 : i32
    %c0_i32_1 = arith.constant 0 : i32
    return %c0_i32, %c0_i32_0 : i32, i32
  }
  func.func @transform_8(%arg0: i32) -> (i32, i32) {
    %c0_i32 = arith.constant 0 : i32
    %c0_i32_0 = arith.constant 0 : i32
    %c0_i32_1 = arith.constant 0 : i32
    return %c0_i32, %c0_i32_0 : i32, i32
  }
  func.func @transform_9(%arg0: i32) -> (i32, i32) {
    %c0_i32 = arith.constant 0 : i32
    %c0_i32_0 = arith.constant 0 : i32
    %c0_i32_1 = arith.constant 0 : i32
    return %c0_i32, %c0_i32_0 : i32, i32
  }
  func.func @transform_10(%arg0: i32) -> (i32, i32) {
    %c0_i32 = arith.constant 0 : i32
    %c0_i32_0 = arith.constant 0 : i32
    %c0_i32_1 = arith.constant 0 : i32
    return %c0_i32, %c0_i32_0 : i32, i32
  }
  func.func @transform_11(%arg0: i32) -> (i32, i32) {
    %c0_i32 = arith.constant 0 : i32
    %c0_i32_0 = arith.constant 0 : i32
    %c0_i32_1 = arith.constant 0 : i32
    return %c0_i32, %c0_i32_0 : i32, i32
  }
  func.func @transform_12(%arg0: i32) -> (i32, i32) {
    %c0_i32 = arith.constant 0 : i32
    %c0_i32_0 = arith.constant 0 : i32
    %c0_i32_1 = arith.constant 0 : i32
    return %c0_i32, %c0_i32_0 : i32, i32
  }
  func.func @transform_13(%arg0: i32) -> (i32, i32, i32) {
    %c0_i32 = arith.constant 0 : i32
    %c0_i32_0 = arith.constant 0 : i32
    %c0_i32_1 = arith.constant 0 : i32
    return %arg0, %c0_i32, %c0_i32_0 : i32, i32, i32
  }
  func.func @transform_14(%arg0: i32) -> (i32, i32, i32) {
    %c0_i32 = arith.constant 0 : i32
    %c0_i32_0 = arith.constant 0 : i32
    %c0_i32_1 = arith.constant 0 : i32
    return %arg0, %c0_i32, %c0_i32_0 : i32, i32, i32
  }
}

</mosaic_0001>

<llo_original>
// kernel: my_transformer_encoder.2
$region0: #{my_transformer_encoder.2}
  #allocation0 [shape = 'u32[]', space=smem, size = 0x4, offset = 0x4, fixed_abs, tag = 'smem constant byte address 0x4 - core index']
  #allocation1 [shape = 'u32[72,128]{1,0:T(1,128)}', space=vmem, size = 0x9000, scoped, tag = 'internal scratch']
  %s0 = inlined_call_operand.vmem [shape: bf16[2,8,32], index: 0, kind: input, shape index: {}]
  %s1 = inlined_call_operand.vmem [shape: bf16[32,96], index: 1, kind: input, shape index: {}]
  %s2 = inlined_call_operand.vmem [shape: f32[1,96], index: 2, kind: input, shape index: {}]
  %s3 = inlined_call_operand.vmem [shape: bf16[32,32], index: 3, kind: input, shape index: {}]
  %s4 = inlined_call_operand.vmem [shape: f32[1,32], index: 4, kind: input, shape index: {}]
  %s5 = inlined_call_operand.vmem [shape: f32[1,32], index: 5, kind: input, shape index: {}]
  %s6 = inlined_call_operand.vmem [shape: f32[1,32], index: 6, kind: input, shape index: {}]
  %s7 = inlined_call_operand.hbm [shape: bf16[32,64], index: 7, kind: input, shape index: {}]
  %s8 = inlined_call_operand.vmem [shape: f32[1,64], index: 8, kind: input, shape index: {}]
  %s9 = inlined_call_operand.vmem [shape: bf16[64,32], index: 9, kind: input, shape index: {}]
  %s10 = inlined_call_operand.vmem [shape: f32[1,32], index: 10, kind: input, shape index: {}]
  %s11 = inlined_call_operand.vmem [shape: f32[1,32], index: 11, kind: input, shape index: {}]
  %s12 = inlined_call_operand.vmem [shape: f32[1,32], index: 12, kind: input, shape index: {}]
  %s13 = inlined_call_operand.vmem [shape: bf16[2,8,32], index: 13, kind: output, shape index: {0}]
  %s14 = inlined_call_operand.hbm [shape: f32[2,8,8], index: 14, kind: output, shape index: {1}]
  %15 = xla_tuple %s13, %s14
  %s16 = sld [smem:[#allocation0]]
  $region74: #{my_transformer_encoder.2} parent=0
    _
  %s18 = ssub.s32 1, %s16
  %s19 = scalar_select 0, %s18, %s16
  $region1: #{my_transformer_encoder.2} parent=0
    #allocation2 [shape = 'u8[8192]{0}', space=vmem, size = 0x2000, scoped, tag = 'input window, operand 7, single buffered']
    #allocation3 [shape = 's32[1]{0}', space=sflag, size = 0x4, scoped, tag = 'scoped memory for my_transformer_encoder.2']
    #allocation4 [shape = 's32[1]{0}', space=sflag, size = 0x4, scoped, tag = 'scoped memory for my_transformer_encoder.2']
    #allocation5 [shape = 'u8[8192]{0}', space=vmem, size = 0x2000, scoped, tag = 'output window, operand 1, single buffered']
    %20 = vsyncpa [#allocation3], 0
    %21 = vsyncpa [#allocation4], 0
    // Predicated region
    $region2: #{my_transformer_encoder.2} parent=1 // pred_check
      _
    $region3: #{my_transformer_encoder.2} parent=1 // pred_check_branch
      %23 = sbr.rel (0) target = $region5
    $region4: #{my_transformer_encoder.2} parent=1 // pred_region
      _
    $region5: #{my_transformer_encoder.2} parent=1 // pred_fallthru
      _
    // Predicated region
    $region6: #{my_transformer_encoder.2} parent=1 // pred_check
      _
    $region7: #{my_transformer_encoder.2} parent=1 // pred_check_branch
      %25 = sbr.rel (0) target = $region9
    $region8: #{my_transformer_encoder.2} parent=1 // pred_region
      _
    $region9: #{my_transformer_encoder.2} parent=1 // pred_fallthru
      _
    // Predicated region
    $region10: #{my_transformer_encoder.2} parent=1 // pred_check
      _
    $region11: #{my_transformer_encoder.2} parent=1 // pred_check_branch
      %27 = sbr.rel (0) target = $region13
    $region12: #{my_transformer_encoder.2} parent=1 // pred_region
      _
    $region13: #{my_transformer_encoder.2} parent=1 // pred_fallthru
      _
    // Predicated region
    $region14: #{my_transformer_encoder.2} parent=1 // pred_check
      _
    $region15: #{my_transformer_encoder.2} parent=1 // pred_check_branch
      %29 = sbr.rel (0) target = $region17
    $region16: #{my_transformer_encoder.2} parent=1 // pred_region
      _
    $region17: #{my_transformer_encoder.2} parent=1 // pred_fallthru
      _
    // Predicated region
    $region18: #{my_transformer_encoder.2} parent=1 // pred_check
      _
    $region19: #{my_transformer_encoder.2} parent=1 // pred_check_branch
      %31 = sbr.rel (0) target = $region21
    $region20: #{my_transformer_encoder.2} parent=1 // pred_region
      _
    $region21: #{my_transformer_encoder.2} parent=1 // pred_fallthru
      _
    // Predicated region
    $region22: #{my_transformer_encoder.2} parent=1 // pred_check
      _
    $region23: #{my_transformer_encoder.2} parent=1 // pred_check_branch
      %33 = sbr.rel (0) target = $region25
    $region24: #{my_transformer_encoder.2} parent=1 // pred_region
      _
    $region25: #{my_transformer_encoder.2} parent=1 // pred_fallthru
      _
    // Predicated region
    $region26: #{my_transformer_encoder.2} parent=1 // pred_check
      _
    $region27: #{my_transformer_encoder.2} parent=1 // pred_check_branch
      %35 = sbr.rel (0) target = $region29
    $region28: #{my_transformer_encoder.2} parent=1 // pred_region
      _
    $region29: #{my_transformer_encoder.2} parent=1 // pred_fallthru
      _
    // Predicated region
    $region30: #{my_transformer_encoder.2} parent=1 // pred_check
      _
    $region31: #{my_transformer_encoder.2} parent=1 // pred_check_branch
      %37 = sbr.rel (0) target = $region33
    $region32: #{my_transformer_encoder.2} parent=1 // pred_region
      %39 = vsyncadd [#allocation3], 0
      %s40 = sshll.u32 %s7, 4
      %s41 = int_to_ptr.hbm [resolvable:$true] %s40
      %s42 = sshll.u32 [#allocation2], 4
      %s43 = int_to_ptr.vmem [resolvable:$true] %s42
      %48 = dma.hbm_to_vmem [thread:$0]  %s41, 256, %s43, [#allocation3], 64, 64, 4
    $region33: #{my_transformer_encoder.2} parent=1 // pred_fallthru
      _
    // Predicated region
    $region34: #{my_transformer_encoder.2} parent=1 // pred_check
      _
    $region35: #{my_transformer_encoder.2} parent=1 // pred_check_branch
      %50 = sbr.rel (0) target = $region37
    $region36: #{my_transformer_encoder.2} parent=1 // pred_region
      _
    $region37: #{my_transformer_encoder.2} parent=1 // pred_fallthru
      _
    // Predicated region
    $region38: #{my_transformer_encoder.2} parent=1 // pred_check
      _
    $region39: #{my_transformer_encoder.2} parent=1 // pred_check_branch
      %52 = sbr.rel (0) target = $region41
    $region40: #{my_transformer_encoder.2} parent=1 // pred_region
      _
    $region41: #{my_transformer_encoder.2} parent=1 // pred_fallthru
      _
    // Predicated region
    $region42: #{my_transformer_encoder.2} parent=1 // pred_check
      _
    $region43: #{my_transformer_encoder.2} parent=1 // pred_check_branch
      %54 = sbr.rel (0) target = $region45
    $region44: #{my_transformer_encoder.2} parent=1 // pred_region
      _
    $region45: #{my_transformer_encoder.2} parent=1 // pred_fallthru
      _
    // Predicated region
    $region46: #{my_transformer_encoder.2} parent=1 // pred_check
      _
    $region47: #{my_transformer_encoder.2} parent=1 // pred_check_branch
      %56 = sbr.rel (0) target = $region49
    $region48: #{my_transformer_encoder.2} parent=1 // pred_region
      _
    $region49: #{my_transformer_encoder.2} parent=1 // pred_fallthru
      _
    // Predicated region
    $region50: #{my_transformer_encoder.2} parent=1 // pred_check
      _
    $region51: #{my_transformer_encoder.2} parent=1 // pred_check_branch
      %58 = sbr.rel (0) target = $region53
    $region52: #{my_transformer_encoder.2} parent=1 // pred_region
      _
    $region53: #{my_transformer_encoder.2} parent=1 // pred_fallthru
      _
    // Predicated region
    $region54: #{my_transformer_encoder.2} parent=1 // pred_check
      _
    $region55: #{my_transformer_encoder.2} parent=1 // pred_check_branch
      %60 = sbr.rel (0) target = $region57
    $region56: #{my_transformer_encoder.2} parent=1 // pred_region
      %62 = dma.done [#allocation3], 256
    $region57: #{my_transformer_encoder.2} parent=1 // pred_fallthru
      _
    %v64 = vld [vmem:[%s0] sm:$0xf]
    %v65 = vld [vmem:[%s0 + $0x4] sm:$0xf]
    %v66 = vunpack.c.l.bf16 %v64
    %v67 = vunpack.c.l.bf16 %v65
    %v68 = vld [vmem:[%s1] sm:$0xf]
    %v69 = vld [vmem:[%s1 + $0x4] sm:$0xf]
    %v70 = vld [vmem:[%s1 + $0x8] sm:$0xf]
    %v71 = vld [vmem:[%s1 + $0xc] sm:$0xf]
    %v72 = vpack.c.bf16 %v67, %v66
    %v73 = vld [vmem:[%s2] sm:$0x1]
    %v75 = vperm.slane %v73, 0
    %v81 = vunpack.c.l.b16 %v68
    %v82 = vunpack.c.l.b16 %v69
    %v83 = vunpack.c.l.b16 %v70
    %v84 = vunpack.c.l.b16 %v71
    %v85 = vpack.c.b16 %v82, %v81
    %v86 = vpack.c.b16 %v84, %v83
    %vm89 = vcmask 261120
    %v91 = vsel %vm89, %v72, 0
    %93 = vmatpush.bf16.msra.mxu0 0
    %94 = vmatpush.bf16.msra.mxu0 0
    %95 = vmatpush.bf16.msra.mxu0 0
    %96 = vmatpush.bf16.msra.mxu0 0
    %97 = vmatpush.bf16.msra.mxu0 0
    %98 = vmatpush.bf16.msra.mxu0 0
    %99 = vmatpush.bf16.msra.mxu0 %v86
    %100 = vmatpush.bf16.msra.mxu0 %v85
    %101 = vmatmul.bf16.gmra.mxu0 %v91
    %v102 = vpop.f32.mrf.mxu0
    %v103 = vadd.f32 %v75, %v102
    %v104 = vpop.f32.mrf.mxu0
    %v105 = vadd.f32 %v75, %v104
    %106 = vdwg.mxu0
    %v107 = vpack.c.bf16 %v103, %v103
    %v108 = vpack.c.bf16 %v105, %v105
    %v110 = vunpack.c.l.b16 %v107
    %v111 = vpack.c.b16 %v110, %v110
    %112 = vrot.lane.b32.xlu0 %v111, 96
    %v113 = vpop.permute.xlu0 %112
    %vm114 = vcmask 64512
    %v116 = vsel %vm114, %v107, 0
    %v119 = vsel %vm114, %v113, 0
    %121 = vmatpush.bf16.xpose.msra.mxu0 0
    %122 = vmatpush.bf16.xpose.msra.mxu0 0
    %123 = vmatpush.bf16.xpose.msra.mxu0 0
    %124 = vmatpush.bf16.xpose.msra.mxu0 0
    %125 = vmatpush.bf16.xpose.msra.mxu0 0
    %126 = vmatpush.bf16.xpose.msra.mxu0 0
    %127 = vmatpush.bf16.xpose.msra.mxu0 0
    %128 = vmatpush.bf16.xpose.msra.mxu0 %v119
    %129 = vmatmul.bf16.gmra.mxu0 %v116
    %v130 = vpop.f32.mrf.mxu0
    %v131 = vadd.f32 0.0, %v130
    %v132 = vpop.f32.mrf.mxu0
    %133 = vdwg.mxu0
    %v135 = vunpack.c.l.b16 %v108
    %v136 = vpack.c.b16 %v135, %v135
    %137 = vrot.lane.b32.xlu0 %v136, 96
    %v138 = vpop.permute.xlu0 %137
    %v140 = vsel %vm114, %v108, 0
    %v143 = vsel %vm114, %v138, 0
    %145 = vmatpush.bf16.xpose.msra.mxu0 0
    %146 = vmatpush.bf16.xpose.msra.mxu0 0
    %147 = vmatpush.bf16.xpose.msra.mxu0 0
    %148 = vmatpush.bf16.xpose.msra.mxu0 0
    %149 = vmatpush.bf16.xpose.msra.mxu0 0
    %150 = vmatpush.bf16.xpose.msra.mxu0 0
    %151 = vmatpush.bf16.xpose.msra.mxu0 0
    %152 = vmatpush.bf16.xpose.msra.mxu0 %v143
    %153 = vmatmul.bf16.gmra.mxu0 %v140
    %v154 = vpop.f32.mrf.mxu0
    %v155 = vadd.f32 0.0, %v154
    %v156 = vpop.f32.mrf.mxu0
    %157 = vdwg.mxu0
    %v158 = vsel %vm114, %v131, -inf
    %159 = vmax.xlane.f32.xlu0 %v158
    %v160 = vpop.xlane.xlu0 %159
    %v161 = vsel %vm114, %v155, -inf
    %162 = vmax.xlane.f32.xlu0 %v161
    %v163 = vpop.xlane.xlu0 %162
    %v164 = vsub.f32 %v131, %v160
    %v165 = vsub.f32 %v155, %v163
    %v166 = vmul.f32 %v164, 1.442695
    %v167 = vpow.pop %v166
    %v168 = vmul.f32 %v165, 1.442695
    %v169 = vpow.pop %v168
    %v170 = vsel %vm114, %v167, 0.0
    %171 = vadd.xlane.f32.xlu0 %v170
    %v172 = vpop.xlane.xlu0 %171
    %v173 = vsel %vm114, %v169, 0.0
    %174 = vadd.xlane.f32.xlu0 %v173
    %v175 = vpop.xlane.xlu0 %174
    %v176 = vrcp.pop %v172
    %v177 = vmul.f32 %v172, %v176
    %v178 = vsub.f32 1.0, %v177
    %v179 = vmul.f32 %v176, %v178
    %v180 = vadd.f32 %v176, %v179
    %vm181 = vweird.f32 %v172
    %vm182 = vweird.f32 %v176
    %vm183 = vmor %vm181, %vm182
    %v184 = vsel %vm183, %v176, %v180
    %v185 = vand.u32 2147483647, %v172
    %vm186 = vcmp.eq.f32.partialorder %v185, 8.507059e+37
    %v187 = vand.u32 %v172, 2147483648
    %v188 = vor.u32 1.1754944e-38, %v187
    %v189 = vsel %vm186, %v188, %v184
    %v190 = vmul.f32 %v167, %v189
    %v191 = vrcp.pop %v175
    %v192 = vmul.f32 %v175, %v191
    %v193 = vsub.f32 1.0, %v192
    %v194 = vmul.f32 %v191, %v193
    %v195 = vadd.f32 %v191, %v194
    %vm196 = vweird.f32 %v175
    %vm197 = vweird.f32 %v191
    %vm198 = vmor %vm196, %vm197
    %v199 = vsel %vm198, %v191, %v195
    %v200 = vand.u32 2147483647, %v175
    %vm201 = vcmp.eq.f32.partialorder %v200, 8.507059e+37
    %v202 = vand.u32 %v175, 2147483648
    %v203 = vor.u32 1.1754944e-38, %v202
    %v204 = vsel %vm201, %v203, %v199
    %v205 = vmul.f32 %v169, %v204
    %v206 = vadd.f32 %v190, 0.0
    %v207 = vadd.f32 %v205, 0.0
    %v208 = vpack.c.bf16 %v190, %v190
    %v209 = vpack.c.bf16 %v205, %v205
    %210 = vrot.lane.b32.xlu0 %v111, 64
    %v211 = vpop.permute.xlu0 %210
    %v213 = vsel %vm114, %v208, 0
    %vm215 = vcmask 1043456
    %v217 = vsel %vm215, %v211, 0
    %219 = vmatpush.bf16.msra.mxu0 0
    %220 = vmatpush.bf16.msra.mxu0 0
    %221 = vmatpush.bf16.msra.mxu0 0
    %222 = vmatpush.bf16.msra.mxu0 0
    %223 = vmatpush.bf16.msra.mxu0 0
    %224 = vmatpush.bf16.msra.mxu0 0
    %225 = vmatpush.bf16.msra.mxu0 0
    %226 = vmatpush.bf16.msra.mxu0 %v217
    %227 = vmatmul.bf16.gmra.mxu0 %v213
    %v228 = vpop.f32.mrf.mxu0
    %v229 = vadd.f32 0.0, %v228
    %v230 = vpop.f32.mrf.mxu0
    %231 = vdwg.mxu0
    %232 = vrot.lane.b32.xlu0 %v136, 64
    %v233 = vpop.permute.xlu0 %232
    %v235 = vsel %vm114, %v209, 0
    %v238 = vsel %vm215, %v233, 0
    %240 = vmatpush.bf16.msra.mxu0 0
    %241 = vmatpush.bf16.msra.mxu0 0
    %242 = vmatpush.bf16.msra.mxu0 0
    %243 = vmatpush.bf16.msra.mxu0 0
    %244 = vmatpush.bf16.msra.mxu0 0
    %245 = vmatpush.bf16.msra.mxu0 0
    %246 = vmatpush.bf16.msra.mxu0 0
    %247 = vmatpush.bf16.msra.mxu0 %v238
    %248 = vmatmul.bf16.gmra.mxu0 %v235
    %v249 = vpop.f32.mrf.mxu0
    %v250 = vadd.f32 0.0, %v249
    %v251 = vpop.f32.mrf.mxu0
    %252 = vdwg.mxu0
    %v253 = vld [vmem:[%s3] sm:$0xf]
    %v254 = vpack.c.bf16 %v250, %v229
    %255 = vrot.lane.b32.xlu0 %v111, 120
    %v256 = vpop.permute.xlu0 %255
    %257 = vrot.lane.b32.xlu0 %v111, 88
    %v258 = vpop.permute.xlu0 %257
    %v260 = vsel %vm114, %v256, 0
    %v263 = vsel %vm114, %v258, 0
    %265 = vmatpush.bf16.xpose.msra.mxu0 0
    %266 = vmatpush.bf16.xpose.msra.mxu0 0
    %267 = vmatpush.bf16.xpose.msra.mxu0 0
    %268 = vmatpush.bf16.xpose.msra.mxu0 0
    %269 = vmatpush.bf16.xpose.msra.mxu0 0
    %270 = vmatpush.bf16.xpose.msra.mxu0 0
    %271 = vmatpush.bf16.xpose.msra.mxu0 0
    %272 = vmatpush.bf16.xpose.msra.mxu0 %v263
    %273 = vmatmul.bf16.gmra.mxu0 %v260
    %v274 = vpop.f32.mrf.mxu0
    %v275 = vadd.f32 0.0, %v274
    %v276 = vpop.f32.mrf.mxu0
    %277 = vdwg.mxu0
    %278 = vrot.lane.b32.xlu0 %v136, 120
    %v279 = vpop.permute.xlu0 %278
    %280 = vrot.lane.b32.xlu0 %v136, 88
    %v281 = vpop.permute.xlu0 %280
    %v283 = vsel %vm114, %v279, 0
    %v286 = vsel %vm114, %v281, 0
    %288 = vmatpush.bf16.xpose.msra.mxu0 0
    %289 = vmatpush.bf16.xpose.msra.mxu0 0
    %290 = vmatpush.bf16.xpose.msra.mxu0 0
    %291 = vmatpush.bf16.xpose.msra.mxu0 0
    %292 = vmatpush.bf16.xpose.msra.mxu0 0
    %293 = vmatpush.bf16.xpose.msra.mxu0 0
    %294 = vmatpush.bf16.xpose.msra.mxu0 0
    %295 = vmatpush.bf16.xpose.msra.mxu0 %v286
    %296 = vmatmul.bf16.gmra.mxu0 %v283
    %v297 = vpop.f32.mrf.mxu0
    %v298 = vadd.f32 0.0, %v297
    %v299 = vpop.f32.mrf.mxu0
    %300 = vdwg.mxu0
    %v301 = vsel %vm114, %v275, -inf
    %302 = vmax.xlane.f32.xlu0 %v301
    %v303 = vpop.xlane.xlu0 %302
    %v304 = vsel %vm114, %v298, -inf
    %305 = vmax.xlane.f32.xlu0 %v304
    %v306 = vpop.xlane.xlu0 %305
    %v307 = vsub.f32 %v275, %v303
    %v308 = vsub.f32 %v298, %v306
    %v309 = vmul.f32 %v307, 1.442695
    %v310 = vpow.pop %v309
    %v311 = vmul.f32 %v308, 1.442695
    %v312 = vpow.pop %v311
    %v313 = vsel %vm114, %v310, 0.0
    %314 = vadd.xlane.f32.xlu0 %v313
    %v315 = vpop.xlane.xlu0 %314
    %v316 = vsel %vm114, %v312, 0.0
    %317 = vadd.xlane.f32.xlu0 %v316
    %v318 = vpop.xlane.xlu0 %317
    %v319 = vrcp.pop %v315
    %v320 = vmul.f32 %v315, %v319
    %v321 = vsub.f32 1.0, %v320
    %v322 = vmul.f32 %v319, %v321
    %v323 = vadd.f32 %v319, %v322
    %vm324 = vweird.f32 %v315
    %vm325 = vweird.f32 %v319
    %vm326 = vmor %vm324, %vm325
    %v327 = vsel %vm326, %v319, %v323
    %v328 = vand.u32 2147483647, %v315
    %vm329 = vcmp.eq.f32.partialorder %v328, 8.507059e+37
    %v330 = vand.u32 %v315, 2147483648
    %v331 = vor.u32 1.1754944e-38, %v330
    %v332 = vsel %vm329, %v331, %v327
    %v333 = vmul.f32 %v310, %v332
    %v334 = vrcp.pop %v318
    %v335 = vmul.f32 %v318, %v334
    %v336 = vsub.f32 1.0, %v335
    %v337 = vmul.f32 %v334, %v336
    %v338 = vadd.f32 %v334, %v337
    %vm339 = vweird.f32 %v318
    %vm340 = vweird.f32 %v334
    %vm341 = vmor %vm339, %vm340
    %v342 = vsel %vm341, %v334, %v338
    %v343 = vand.u32 2147483647, %v318
    %vm344 = vcmp.eq.f32.partialorder %v343, 8.507059e+37
    %v345 = vand.u32 %v318, 2147483648
    %v346 = vor.u32 1.1754944e-38, %v345
    %v347 = vsel %vm344, %v346, %v342
    %v348 = vmul.f32 %v312, %v347
    %v349 = vadd.f32 %v206, %v333
    %v350 = vadd.f32 %v207, %v348
    %v351 = vpack.c.bf16 %v333, %v333
    %v352 = vpack.c.bf16 %v348, %v348
    %353 = vrot.lane.b32.xlu0 %v111, 56
    %v354 = vpop.permute.xlu0 %353
    %v356 = vsel %vm114, %v351, 0
    %v359 = vsel %vm215, %v354, 0
    %361 = vmatpush.bf16.msra.mxu0 0
    %362 = vmatpush.bf16.msra.mxu0 0
    %363 = vmatpush.bf16.msra.mxu0 0
    %364 = vmatpush.bf16.msra.mxu0 0
    %365 = vmatpush.bf16.msra.mxu0 0
    %366 = vmatpush.bf16.msra.mxu0 0
    %367 = vmatpush.bf16.msra.mxu0 0
    %368 = vmatpush.bf16.msra.mxu0 %v359
    %369 = vmatmul.bf16.gmra.mxu0 %v356
    %v370 = vpop.f32.mrf.mxu0
    %v371 = vadd.f32 0.0, %v370
    %v372 = vpop.f32.mrf.mxu0
    %373 = vdwg.mxu0
    %374 = vrot.lane.b32.xlu0 %v136, 56
    %v375 = vpop.permute.xlu0 %374
    %v377 = vsel %vm114, %v352, 0
    %v380 = vsel %vm215, %v375, 0
    %382 = vmatpush.bf16.msra.mxu0 0
    %383 = vmatpush.bf16.msra.mxu0 0
    %384 = vmatpush.bf16.msra.mxu0 0
    %385 = vmatpush.bf16.msra.mxu0 0
    %386 = vmatpush.bf16.msra.mxu0 0
    %387 = vmatpush.bf16.msra.mxu0 0
    %388 = vmatpush.bf16.msra.mxu0 0
    %389 = vmatpush.bf16.msra.mxu0 %v380
    %390 = vmatmul.bf16.gmra.mxu0 %v377
    %v391 = vpop.f32.mrf.mxu0
    %v392 = vadd.f32 0.0, %v391
    %v393 = vpop.f32.mrf.mxu0
    %394 = vdwg.mxu0
    %v395 = vld [vmem:[%s3 + $0x4] sm:$0xf]
    %v396 = vpack.c.bf16 %v392, %v371
    %v398 = vsel %vm114, %v396, 0
    %v401 = vsel %vm215, %v395, 0
    %403 = vmatpush.bf16.msra.mxu0 0
    %404 = vmatpush.bf16.msra.mxu0 0
    %405 = vmatpush.bf16.msra.mxu0 0
    %406 = vmatpush.bf16.msra.mxu0 0
    %407 = vmatpush.bf16.msra.mxu0 0
    %408 = vmatpush.bf16.msra.mxu0 0
    %409 = vmatpush.bf16.msra.mxu0 0
    %410 = vmatpush.bf16.msra.mxu0 %v401
    %411 = vmatmul.bf16.gmra.mxu0 %v398
    %v412 = vpop.f32.mrf.mxu0
    %v413 = vadd.f32 0.0, %v412
    %v414 = vpop.f32.mrf.mxu0
    %v415 = vadd.f32 0.0, %v414
    %416 = vdwg.mxu0
    %v418 = vsel %vm114, %v254, 0
    %v421 = vsel %vm215, %v253, 0
    %423 = vmatpush.bf16.msra.mxu0 0
    %424 = vmatpush.bf16.msra.mxu0 0
    %425 = vmatpush.bf16.msra.mxu0 0
    %426 = vmatpush.bf16.msra.mxu0 0
    %427 = vmatpush.bf16.msra.mxu0 0
    %428 = vmatpush.bf16.msra.mxu0 0
    %429 = vmatpush.bf16.msra.mxu0 0
    %430 = vmatpush.bf16.msra.mxu0 %v421
    %431 = vmatmul.bf16.gmra.mxu0 %v418
    %v432 = vpop.f32.mrf.mxu0
    %v433 = vadd.f32 %v413, %v432
    %v434 = vpop.f32.mrf.mxu0
    %v435 = vadd.f32 %v415, %v434
    %436 = vdwg.mxu0
    %437 = vrot.lane.b32.xlu0 %v111, 112
    %v438 = vpop.permute.xlu0 %437
    %439 = vrot.lane.b32.xlu0 %v111, 80
    %v440 = vpop.permute.xlu0 %439
    %v442 = vsel %vm114, %v438, 0
    %v445 = vsel %vm114, %v440, 0
    %447 = vmatpush.bf16.xpose.msra.mxu0 0
    %448 = vmatpush.bf16.xpose.msra.mxu0 0
    %449 = vmatpush.bf16.xpose.msra.mxu0 0
    %450 = vmatpush.bf16.xpose.msra.mxu0 0
    %451 = vmatpush.bf16.xpose.msra.mxu0 0
    %452 = vmatpush.bf16.xpose.msra.mxu0 0
    %453 = vmatpush.bf16.xpose.msra.mxu0 0
    %454 = vmatpush.bf16.xpose.msra.mxu0 %v445
    %455 = vmatmul.bf16.gmra.mxu0 %v442
    %v456 = vpop.f32.mrf.mxu0
    %v457 = vadd.f32 0.0, %v456
    %v458 = vpop.f32.mrf.mxu0
    %459 = vdwg.mxu0
    %460 = vrot.lane.b32.xlu0 %v136, 112
    %v461 = vpop.permute.xlu0 %460
    %462 = vrot.lane.b32.xlu0 %v136, 80
    %v463 = vpop.permute.xlu0 %462
    %v465 = vsel %vm114, %v461, 0
    %v468 = vsel %vm114, %v463, 0
    %470 = vmatpush.bf16.xpose.msra.mxu0 0
    %471 = vmatpush.bf16.xpose.msra.mxu0 0
    %472 = vmatpush.bf16.xpose.msra.mxu0 0
    %473 = vmatpush.bf16.xpose.msra.mxu0 0
    %474 = vmatpush.bf16.xpose.msra.mxu0 0
    %475 = vmatpush.bf16.xpose.msra.mxu0 0
    %476 = vmatpush.bf16.xpose.msra.mxu0 0
    %477 = vmatpush.bf16.xpose.msra.mxu0 %v468
    %478 = vmatmul.bf16.gmra.mxu0 %v465
    %v479 = vpop.f32.mrf.mxu0
    %v480 = vadd.f32 0.0, %v479
    %v481 = vpop.f32.mrf.mxu0
    %482 = vdwg.mxu0
    %v483 = vsel %vm114, %v457, -inf
    %484 = vmax.xlane.f32.xlu0 %v483
    %v485 = vpop.xlane.xlu0 %484
    %v486 = vsel %vm114, %v480, -inf
    %487 = vmax.xlane.f32.xlu0 %v486
    %v488 = vpop.xlane.xlu0 %487
    %v489 = vsub.f32 %v457, %v485
    %v490 = vsub.f32 %v480, %v488
    %v491 = vmul.f32 %v489, 1.442695
    %v492 = vpow.pop %v491
    %v493 = vmul.f32 %v490, 1.442695
    %v494 = vpow.pop %v493
    %v495 = vsel %vm114, %v492, 0.0
    %496 = vadd.xlane.f32.xlu0 %v495
    %v497 = vpop.xlane.xlu0 %496
    %v498 = vsel %vm114, %v494, 0.0
    %499 = vadd.xlane.f32.xlu0 %v498
    %v500 = vpop.xlane.xlu0 %499
    %v501 = vrcp.pop %v497
    %v502 = vmul.f32 %v497, %v501
    %v503 = vsub.f32 1.0, %v502
    %v504 = vmul.f32 %v501, %v503
    %v505 = vadd.f32 %v501, %v504
    %vm506 = vweird.f32 %v497
    %vm507 = vweird.f32 %v501
    %vm508 = vmor %vm506, %vm507
    %v509 = vsel %vm508, %v501, %v505
    %v510 = vand.u32 2147483647, %v497
    %vm511 = vcmp.eq.f32.partialorder %v510, 8.507059e+37
    %v512 = vand.u32 %v497, 2147483648
    %v513 = vor.u32 1.1754944e-38, %v512
    %v514 = vsel %vm511, %v513, %v509
    %v515 = vmul.f32 %v492, %v514
    %v516 = vrcp.pop %v500
    %v517 = vmul.f32 %v500, %v516
    %v518 = vsub.f32 1.0, %v517
    %v519 = vmul.f32 %v516, %v518
    %v520 = vadd.f32 %v516, %v519
    %vm521 = vweird.f32 %v500
    %vm522 = vweird.f32 %v516
    %vm523 = vmor %vm521, %vm522
    %v524 = vsel %vm523, %v516, %v520
    %v525 = vand.u32 2147483647, %v500
    %vm526 = vcmp.eq.f32.partialorder %v525, 8.507059e+37
    %v527 = vand.u32 %v500, 2147483648
    %v528 = vor.u32 1.1754944e-38, %v527
    %v529 = vsel %vm526, %v528, %v524
    %v530 = vmul.f32 %v494, %v529
    %v531 = vadd.f32 %v349, %v515
    %v532 = vadd.f32 %v350, %v530
    %v533 = vpack.c.bf16 %v515, %v515
    %v534 = vpack.c.bf16 %v530, %v530
    %535 = vrot.lane.b32.xlu0 %v111, 48
    %v536 = vpop.permute.xlu0 %535
    %v538 = vsel %vm114, %v533, 0
    %v541 = vsel %vm215, %v536, 0
    %543 = vmatpush.bf16.msra.mxu0 0
    %544 = vmatpush.bf16.msra.mxu0 0
    %545 = vmatpush.bf16.msra.mxu0 0
    %546 = vmatpush.bf16.msra.mxu0 0
    %547 = vmatpush.bf16.msra.mxu0 0
    %548 = vmatpush.bf16.msra.mxu0 0
    %549 = vmatpush.bf16.msra.mxu0 0
    %550 = vmatpush.bf16.msra.mxu0 %v541
    %551 = vmatmul.bf16.gmra.mxu0 %v538
    %v552 = vpop.f32.mrf.mxu0
    %v553 = vadd.f32 0.0, %v552
    %v554 = vpop.f32.mrf.mxu0
    %555 = vdwg.mxu0
    %556 = vrot.lane.b32.xlu0 %v136, 48
    %v557 = vpop.permute.xlu0 %556
    %v559 = vsel %vm114, %v534, 0
    %v562 = vsel %vm215, %v557, 0
    %564 = vmatpush.bf16.msra.mxu0 0
    %565 = vmatpush.bf16.msra.mxu0 0
    %566 = vmatpush.bf16.msra.mxu0 0
    %567 = vmatpush.bf16.msra.mxu0 0
    %568 = vmatpush.bf16.msra.mxu0 0
    %569 = vmatpush.bf16.msra.mxu0 0
    %570 = vmatpush.bf16.msra.mxu0 0
    %571 = vmatpush.bf16.msra.mxu0 %v562
    %572 = vmatmul.bf16.gmra.mxu0 %v559
    %v573 = vpop.f32.mrf.mxu0
    %v574 = vadd.f32 0.0, %v573
    %v575 = vpop.f32.mrf.mxu0
    %576 = vdwg.mxu0
    %v577 = vld [vmem:[%s3 + $0x8] sm:$0xf]
    %v578 = vpack.c.bf16 %v574, %v553
    %v580 = vsel %vm114, %v578, 0
    %v583 = vsel %vm215, %v577, 0
    %585 = vmatpush.bf16.msra.mxu0 0
    %586 = vmatpush.bf16.msra.mxu0 0
    %587 = vmatpush.bf16.msra.mxu0 0
    %588 = vmatpush.bf16.msra.mxu0 0
    %589 = vmatpush.bf16.msra.mxu0 0
    %590 = vmatpush.bf16.msra.mxu0 0
    %591 = vmatpush.bf16.msra.mxu0 0
    %592 = vmatpush.bf16.msra.mxu0 %v583
    %593 = vmatmul.bf16.gmra.mxu0 %v580
    %v594 = vpop.f32.mrf.mxu0
    %v595 = vadd.f32 0.0, %v594
    %v596 = vpop.f32.mrf.mxu0
    %v597 = vadd.f32 0.0, %v596
    %598 = vdwg.mxu0
    %v599 = vadd.f32 %v433, %v595
    %v600 = vadd.f32 %v435, %v597
    %601 = vrot.lane.b32.xlu0 %v111, 104
    %v602 = vpop.permute.xlu0 %601
    %603 = vrot.lane.b32.xlu0 %v111, 72
    %v604 = vpop.permute.xlu0 %603
    %v606 = vsel %vm114, %v602, 0
    %v609 = vsel %vm114, %v604, 0
    %611 = vmatpush.bf16.xpose.msra.mxu0 0
    %612 = vmatpush.bf16.xpose.msra.mxu0 0
    %613 = vmatpush.bf16.xpose.msra.mxu0 0
    %614 = vmatpush.bf16.xpose.msra.mxu0 0
    %615 = vmatpush.bf16.xpose.msra.mxu0 0
    %616 = vmatpush.bf16.xpose.msra.mxu0 0
    %617 = vmatpush.bf16.xpose.msra.mxu0 0
    %618 = vmatpush.bf16.xpose.msra.mxu0 %v609
    %619 = vmatmul.bf16.gmra.mxu0 %v606
    %v620 = vpop.f32.mrf.mxu0
    %v621 = vadd.f32 0.0, %v620
    %v622 = vpop.f32.mrf.mxu0
    %623 = vdwg.mxu0
    %624 = vrot.lane.b32.xlu0 %v136, 104
    %v625 = vpop.permute.xlu0 %624
    %626 = vrot.lane.b32.xlu0 %v136, 72
    %v627 = vpop.permute.xlu0 %626
    %v629 = vsel %vm114, %v625, 0
    %v632 = vsel %vm114, %v627, 0
    %634 = vmatpush.bf16.xpose.msra.mxu0 0
    %635 = vmatpush.bf16.xpose.msra.mxu0 0
    %636 = vmatpush.bf16.xpose.msra.mxu0 0
    %637 = vmatpush.bf16.xpose.msra.mxu0 0
    %638 = vmatpush.bf16.xpose.msra.mxu0 0
    %639 = vmatpush.bf16.xpose.msra.mxu0 0
    %640 = vmatpush.bf16.xpose.msra.mxu0 0
    %641 = vmatpush.bf16.xpose.msra.mxu0 %v632
    %642 = vmatmul.bf16.gmra.mxu0 %v629
    %v643 = vpop.f32.mrf.mxu0
    %v644 = vadd.f32 0.0, %v643
    %v645 = vpop.f32.mrf.mxu0
    %646 = vdwg.mxu0
    %v647 = vsel %vm114, %v621, -inf
    %648 = vmax.xlane.f32.xlu0 %v647
    %v649 = vpop.xlane.xlu0 %648
    %v650 = vsel %vm114, %v644, -inf
    %651 = vmax.xlane.f32.xlu0 %v650
    %v652 = vpop.xlane.xlu0 %651
    %v653 = vsub.f32 %v621, %v649
    %v654 = vsub.f32 %v644, %v652
    %v655 = vmul.f32 %v653, 1.442695
    %v656 = vpow.pop %v655
    %v657 = vmul.f32 %v654, 1.442695
    %v658 = vpow.pop %v657
    %v659 = vsel %vm114, %v656, 0.0
    %660 = vadd.xlane.f32.xlu0 %v659
    %v661 = vpop.xlane.xlu0 %660
    %v662 = vsel %vm114, %v658, 0.0
    %663 = vadd.xlane.f32.xlu0 %v662
    %v664 = vpop.xlane.xlu0 %663
    %v665 = vrcp.pop %v661
    %v666 = vmul.f32 %v661, %v665
    %v667 = vsub.f32 1.0, %v666
    %v668 = vmul.f32 %v665, %v667
    %v669 = vadd.f32 %v665, %v668
    %vm670 = vweird.f32 %v661
    %vm671 = vweird.f32 %v665
    %vm672 = vmor %vm670, %vm671
    %v673 = vsel %vm672, %v665, %v669
    %v674 = vand.u32 2147483647, %v661
    %vm675 = vcmp.eq.f32.partialorder %v674, 8.507059e+37
    %v676 = vand.u32 %v661, 2147483648
    %v677 = vor.u32 1.1754944e-38, %v676
    %v678 = vsel %vm675, %v677, %v673
    %v679 = vmul.f32 %v656, %v678
    %v680 = vrcp.pop %v664
    %v681 = vmul.f32 %v664, %v680
    %v682 = vsub.f32 1.0, %v681
    %v683 = vmul.f32 %v680, %v682
    %v684 = vadd.f32 %v680, %v683
    %vm685 = vweird.f32 %v664
    %vm686 = vweird.f32 %v680
    %vm687 = vmor %vm685, %vm686
    %v688 = vsel %vm687, %v680, %v684
    %v689 = vand.u32 2147483647, %v664
    %vm690 = vcmp.eq.f32.partialorder %v689, 8.507059e+37
    %v691 = vand.u32 %v664, 2147483648
    %v692 = vor.u32 1.1754944e-38, %v691
    %v693 = vsel %vm690, %v692, %v688
    %v694 = vmul.f32 %v658, %v693
    %v695 = vadd.f32 %v531, %v679
    %v696 = vadd.f32 %v532, %v694
    %v697 = vpack.c.bf16 %v679, %v679
    %v698 = vpack.c.bf16 %v694, %v694
    %699 = vrot.lane.b32.xlu0 %v111, 40
    %v700 = vpop.permute.xlu0 %699
    %v702 = vsel %vm114, %v697, 0
    %v705 = vsel %vm215, %v700, 0
    %707 = vmatpush.bf16.msra.mxu0 0
    %708 = vmatpush.bf16.msra.mxu0 0
    %709 = vmatpush.bf16.msra.mxu0 0
    %710 = vmatpush.bf16.msra.mxu0 0
    %711 = vmatpush.bf16.msra.mxu0 0
    %712 = vmatpush.bf16.msra.mxu0 0
    %713 = vmatpush.bf16.msra.mxu0 0
    %714 = vmatpush.bf16.msra.mxu0 %v705
    %715 = vmatmul.bf16.gmra.mxu0 %v702
    %v716 = vpop.f32.mrf.mxu0
    %v717 = vadd.f32 0.0, %v716
    %v718 = vpop.f32.mrf.mxu0
    %719 = vdwg.mxu0
    %720 = vrot.lane.b32.xlu0 %v136, 40
    %v721 = vpop.permute.xlu0 %720
    %v723 = vsel %vm114, %v698, 0
    %v726 = vsel %vm215, %v721, 0
    %728 = vmatpush.bf16.msra.mxu0 0
    %729 = vmatpush.bf16.msra.mxu0 0
    %730 = vmatpush.bf16.msra.mxu0 0
    %731 = vmatpush.bf16.msra.mxu0 0
    %732 = vmatpush.bf16.msra.mxu0 0
    %733 = vmatpush.bf16.msra.mxu0 0
    %734 = vmatpush.bf16.msra.mxu0 0
    %735 = vmatpush.bf16.msra.mxu0 %v726
    %736 = vmatmul.bf16.gmra.mxu0 %v723
    %v737 = vpop.f32.mrf.mxu0
    %v738 = vadd.f32 0.0, %v737
    %v739 = vpop.f32.mrf.mxu0
    %740 = vdwg.mxu0
    %v741 = vld [vmem:[%s3 + $0xc] sm:$0xf]
    %v742 = vpack.c.bf16 %v738, %v717
    %v744 = vsel %vm114, %v742, 0
    %v747 = vsel %vm215, %v741, 0
    %749 = vmatpush.bf16.msra.mxu0 0
    %750 = vmatpush.bf16.msra.mxu0 0
    %751 = vmatpush.bf16.msra.mxu0 0
    %752 = vmatpush.bf16.msra.mxu0 0
    %753 = vmatpush.bf16.msra.mxu0 0
    %754 = vmatpush.bf16.msra.mxu0 0
    %755 = vmatpush.bf16.msra.mxu0 0
    %756 = vmatpush.bf16.msra.mxu0 %v747
    %757 = vmatmul.bf16.gmra.mxu0 %v744
    %v758 = vpop.f32.mrf.mxu0
    %v759 = vadd.f32 0.0, %v758
    %v760 = vpop.f32.mrf.mxu0
    %v761 = vadd.f32 0.0, %v760
    %762 = vdwg.mxu0
    %v763 = vadd.f32 %v599, %v759
    %v764 = vadd.f32 %v600, %v761
    %v765 = vmul.f32 %v695, 0.25
    %v766 = vmul.f32 %v696, 0.25
    %767 = vst.msk [vmem:[#allocation5] sm:$0xff] %vm114, %v765
    %768 = vst.msk [vmem:[#allocation5 + $0x8] sm:$0xff] %vm114, %v766
    %v769 = vld [vmem:[%s4] sm:$0x1]
    %v771 = vperm.slane %v769, 0
    %v773 = vadd.f32 %v763, %v771
    %v774 = vadd.f32 %v764, %v771
    %v775 = vld [vmem:[%s5] sm:$0x1]
    %v776 = vld [vmem:[%s6] sm:$0x1]
    %v777 = vadd.f32 %v66, %v773
    %v778 = vadd.f32 %v67, %v774
    %v779 = vsel %vm89, %v777, 0.0
    %780 = vadd.xlane.f32.xlu0 %v779
    %v781 = vpop.xlane.xlu0 %780
    %v782 = vsel %vm89, %v778, 0.0
    %783 = vadd.xlane.f32.xlu0 %v782
    %v784 = vpop.xlane.xlu0 %783
    %v785 = vrcp.pop 32.0
    %v786 = vmul.f32 32.0, %v785
    %v787 = vsub.f32 1.0, %v786
    %v788 = vmul.f32 %v785, %v787
    %v789 = vadd.f32 %v785, %v788
    %vm790 = vweird.f32 %v785
    %v791 = vsel %vm790, %v785, %v789
    %v792 = vmul.f32 %v781, %v791
    %v793 = vmul.f32 %v784, %v791
    %v794 = vsub.f32 %v777, %v792
    %v795 = vsub.f32 %v778, %v793
    %v796 = vmul.f32 %v794, %v794
    %v797 = vmul.f32 %v795, %v795
    %v798 = vsel %vm89, %v796, 0.0
    %799 = vadd.xlane.f32.xlu0 %v798
    %v800 = vpop.xlane.xlu0 %799
    %v801 = vsel %vm89, %v797, 0.0
    %802 = vadd.xlane.f32.xlu0 %v801
    %v803 = vpop.xlane.xlu0 %802
    %v804 = vmul.f32 %v800, %v791
    %v805 = vmul.f32 %v803, %v791
    %v806 = vadd.f32 %v804, 1e-05
    %v807 = vadd.f32 %v805, 1e-05
    %v808 = vrsqrt.pop %v806
    %v809 = vmul.f32 %v808, %v806
    %v810 = vmul.f32 %v809, %v808
    %v811 = vmul.f32 0.5, %v810
    %v812 = vsub.f32 1.5, %v811
    %v813 = vmul.f32 %v808, %v812
    %vm814 = vweird.f32 %v806
    %vm815 = vweird.f32 %v808
    %vm816 = vmor %vm814, %vm815
    %v817 = vsel %vm816, %v808, %v813
    %v818 = vrsqrt.pop %v807
    %v819 = vmul.f32 %v818, %v807
    %v820 = vmul.f32 %v819, %v818
    %v821 = vmul.f32 0.5, %v820
    %v822 = vsub.f32 1.5, %v821
    %v823 = vmul.f32 %v818, %v822
    %vm824 = vweird.f32 %v807
    %vm825 = vweird.f32 %v818
    %vm826 = vmor %vm824, %vm825
    %v827 = vsel %vm826, %v818, %v823
    %v828 = vmul.f32 %v794, %v817
    %v829 = vmul.f32 %v795, %v827
    %v831 = vperm.slane %v775, 0
    %v833 = vmul.f32 %v828, %v831
    %v834 = vmul.f32 %v829, %v831
    %v836 = vperm.slane %v776, 0
    %v838 = vadd.f32 %v833, %v836
    %v839 = vadd.f32 %v834, %v836
    %v840 = vld [vmem:[#allocation2] sm:$0xf]
    %v841 = vld [vmem:[#allocation2 + $0x4] sm:$0xf]
    %v842 = vld [vmem:[#allocation2 + $0x8] sm:$0xf]
    %v843 = vld [vmem:[#allocation2 + $0xc] sm:$0xf]
    %v844 = vpack.c.bf16 %v839, %v838
    %v845 = vld [vmem:[%s8] sm:$0x1]
    %v847 = vperm.slane %v845, 0
    %v853 = vunpack.c.l.b16 %v840
    %v854 = vunpack.c.l.b16 %v841
    %v855 = vunpack.c.l.b16 %v842
    %v856 = vunpack.c.l.b16 %v843
    %v857 = vpack.c.b16 %v854, %v853
    %v858 = vpack.c.b16 %v856, %v855
    %v862 = vsel %vm89, %v844, 0
    %864 = vmatpush.bf16.msra.mxu0 0
    %865 = vmatpush.bf16.msra.mxu0 0
    %866 = vmatpush.bf16.msra.mxu0 0
    %867 = vmatpush.bf16.msra.mxu0 0
    %868 = vmatpush.bf16.msra.mxu0 0
    %869 = vmatpush.bf16.msra.mxu0 0
    %870 = vmatpush.bf16.msra.mxu0 %v858
    %871 = vmatpush.bf16.msra.mxu0 %v857
    %872 = vmatmul.bf16.gmra.mxu0 %v862
    %v873 = vpop.f32.mrf.mxu0
    %v874 = vadd.f32 %v847, %v873
    %v875 = vpop.f32.mrf.mxu0
    %v876 = vadd.f32 %v847, %v875
    %877 = vdwg.mxu0
    %v878 = vmax.f32 %v874, 0.0
    %v879 = vmax.f32 %v876, 0.0
    %v880 = vld [vmem:[%s9] sm:$0xf]
    %v881 = vld [vmem:[%s9 + $0x4] sm:$0xf]
    %v882 = vld [vmem:[%s9 + $0x8] sm:$0xf]
    %v883 = vld [vmem:[%s9 + $0xc] sm:$0xf]
    %v884 = vld [vmem:[%s9 + $0x10] sm:$0xf]
    %v885 = vld [vmem:[%s9 + $0x14] sm:$0xf]
    %v886 = vld [vmem:[%s9 + $0x18] sm:$0xf]
    %v887 = vld [vmem:[%s9 + $0x1c] sm:$0xf]
    %v888 = vpack.c.bf16 %v879, %v878
    %v889 = vld [vmem:[%s10] sm:$0x1]
    %v891 = vperm.slane %v889, 0
    %v901 = vunpack.c.l.b16 %v880
    %v902 = vunpack.c.l.b16 %v881
    %v903 = vunpack.c.l.b16 %v882
    %v904 = vunpack.c.l.b16 %v883
    %v905 = vunpack.c.l.b16 %v884
    %v906 = vunpack.c.l.b16 %v885
    %v907 = vunpack.c.l.b16 %v886
    %v908 = vunpack.c.l.b16 %v887
    %v909 = vpack.c.b16 %v902, %v901
    %v910 = vpack.c.b16 %v904, %v903
    %v911 = vpack.c.b16 %v906, %v905
    %v912 = vpack.c.b16 %v908, %v907
    %vm917 = vcmask 523264
    %v919 = vsel %vm917, %v888, 0
    %921 = vmatpush.bf16.msra.mxu0 0
    %922 = vmatpush.bf16.msra.mxu0 0
    %923 = vmatpush.bf16.msra.mxu0 0
    %924 = vmatpush.bf16.msra.mxu0 0
    %925 = vmatpush.bf16.msra.mxu0 %v912
    %926 = vmatpush.bf16.msra.mxu0 %v911
    %927 = vmatpush.bf16.msra.mxu0 %v910
    %928 = vmatpush.bf16.msra.mxu0 %v909
    %929 = vmatmul.bf16.gmra.mxu0 %v919
    %v930 = vpop.f32.mrf.mxu0
    %v931 = vadd.f32 %v891, %v930
    %v932 = vpop.f32.mrf.mxu0
    %v933 = vadd.f32 %v891, %v932
    %934 = vdwg.mxu0
    %v935 = vld [vmem:[%s11] sm:$0x1]
    %v936 = vld [vmem:[%s12] sm:$0x1]
    %v937 = vadd.f32 %v838, %v931
    %v938 = vadd.f32 %v839, %v933
    %v939 = vsel %vm89, %v937, 0.0
    %940 = vadd.xlane.f32.xlu0 %v939
    %v941 = vpop.xlane.xlu0 %940
    %v942 = vsel %vm89, %v938, 0.0
    %943 = vadd.xlane.f32.xlu0 %v942
    %v944 = vpop.xlane.xlu0 %943
    %v945 = vmul.f32 %v941, %v791
    %v946 = vmul.f32 %v944, %v791
    %v947 = vsub.f32 %v937, %v945
    %v948 = vsub.f32 %v938, %v946
    %v949 = vmul.f32 %v947, %v947
    %v950 = vmul.f32 %v948, %v948
    %v951 = vsel %vm89, %v949, 0.0
    %952 = vadd.xlane.f32.xlu0 %v951
    %v953 = vpop.xlane.xlu0 %952
    %v954 = vsel %vm89, %v950, 0.0
    %955 = vadd.xlane.f32.xlu0 %v954
    %v956 = vpop.xlane.xlu0 %955
    %v957 = vmul.f32 %v953, %v791
    %v958 = vmul.f32 %v956, %v791
    %v959 = vadd.f32 %v957, 1e-05
    %v960 = vadd.f32 %v958, 1e-05
    %v961 = vrsqrt.pop %v959
    %v962 = vmul.f32 %v961, %v959
    %v963 = vmul.f32 %v962, %v961
    %v964 = vmul.f32 0.5, %v963
    %v965 = vsub.f32 1.5, %v964
    %v966 = vmul.f32 %v961, %v965
    %vm967 = vweird.f32 %v959
    %vm968 = vweird.f32 %v961
    %vm969 = vmor %vm967, %vm968
    %v970 = vsel %vm969, %v961, %v966
    %v971 = vrsqrt.pop %v960
    %v972 = vmul.f32 %v971, %v960
    %v973 = vmul.f32 %v972, %v971
    %v974 = vmul.f32 0.5, %v973
    %v975 = vsub.f32 1.5, %v974
    %v976 = vmul.f32 %v971, %v975
    %vm977 = vweird.f32 %v960
    %vm978 = vweird.f32 %v971
    %vm979 = vmor %vm977, %vm978
    %v980 = vsel %vm979, %v971, %v976
    %v981 = vmul.f32 %v947, %v970
    %v982 = vmul.f32 %v948, %v980
    %v984 = vperm.slane %v935, 0
    %v986 = vmul.f32 %v981, %v984
    %v987 = vmul.f32 %v982, %v984
    %v989 = vperm.slane %v936, 0
    %v991 = vadd.f32 %v986, %v989
    %v992 = vadd.f32 %v987, %v989
    %v993 = vpack.c.bf16 %v991, %v991
    %v994 = vpack.c.bf16 %v992, %v992
    %vm995 = vcmask 257024
    %996 = vst.msk [vmem:[%s13] sm:$0xf] %vm995, %v993
    %997 = vst.msk [vmem:[%s13 + $0x4] sm:$0xf] %vm995, %v994
    // Predicated region
    $region58: #{my_transformer_encoder.2} parent=1 // pred_check
      _
    $region59: #{my_transformer_encoder.2} parent=1 // pred_check_branch
      %999 = sbr.rel (0) target = $region61
    $region60: #{my_transformer_encoder.2} parent=1 // pred_region
      _
    $region61: #{my_transformer_encoder.2} parent=1 // pred_fallthru
      _
    // Predicated region
    $region62: #{my_transformer_encoder.2} parent=1 // pred_check
      _
    $region63: #{my_transformer_encoder.2} parent=1 // pred_check_branch
      %1001 = sbr.rel (0) target = $region65
    $region64: #{my_transformer_encoder.2} parent=1 // pred_region
      %1003 = vsyncadd [#allocation4], 0
      %s1004 = sshll.u32 [#allocation5], 4
      %s1005 = int_to_ptr.vmem [resolvable:$true] %s1004
      %s1006 = sshll.u32 %s14, 4
      %s1007 = int_to_ptr.hbm [resolvable:$true] %s1006
      %1012 = dma.vmem_to_hbm [thread:$0]  %s1005, 256, %s1007, [#allocation4], 128, 128, 8
    $region65: #{my_transformer_encoder.2} parent=1 // pred_fallthru
      _
    // Predicated region
    $region66: #{my_transformer_encoder.2} parent=1 // pred_check
      _
    $region67: #{my_transformer_encoder.2} parent=1 // pred_check_branch
      %1014 = sbr.rel (0) target = $region69
    $region68: #{my_transformer_encoder.2} parent=1 // pred_region
      _
    $region69: #{my_transformer_encoder.2} parent=1 // pred_fallthru
      _
    // Predicated region
    $region70: #{my_transformer_encoder.2} parent=1 // pred_check
      _
    $region71: #{my_transformer_encoder.2} parent=1 // pred_check_branch
      %1016 = sbr.rel (0) target = $region73
    $region72: #{my_transformer_encoder.2} parent=1 // pred_region
      %1018 = dma.done [#allocation4], 256
    $region73: #{my_transformer_encoder.2} parent=1 // pred_fallthru
      _
    %1019 = vsyncpa [#allocation3], 1
    %1020 = vsyncpa [#allocation4], 1

// kernel: my_transformer_encoder.3
$region0: #{my_transformer_encoder.3}
  #allocation0 [shape = 'u32[]', space=smem, size = 0x4, offset = 0x4, fixed_abs, tag = 'smem constant byte address 0x4 - core index']
  #allocation1 [shape = 'u32[72,128]{1,0:T(1,128)}', space=vmem, size = 0x9000, scoped, tag = 'internal scratch']
  %s0 = inlined_call_operand.vmem [shape: bf16[2,8,32], index: 0, kind: input, shape index: {}]
  %s1 = inlined_call_operand.vmem [shape: bf16[32,96], index: 1, kind: input, shape index: {}]
  %s2 = inlined_call_operand.vmem [shape: f32[1,96], index: 2, kind: input, shape index: {}]
  %s3 = inlined_call_operand.vmem [shape: bf16[32,32], index: 3, kind: input, shape index: {}]
  %s4 = inlined_call_operand.vmem [shape: f32[1,32], index: 4, kind: input, shape index: {}]
  %s5 = inlined_call_operand.vmem [shape: f32[1,32], index: 5, kind: input, shape index: {}]
  %s6 = inlined_call_operand.vmem [shape: f32[1,32], index: 6, kind: input, shape index: {}]
  %s7 = inlined_call_operand.vmem [shape: bf16[32,64], index: 7, kind: input, shape index: {}]
  %s8 = inlined_call_operand.vmem [shape: f32[1,64], index: 8, kind: input, shape index: {}]
  %s9 = inlined_call_operand.vmem [shape: bf16[64,32], index: 9, kind: input, shape index: {}]
  %s10 = inlined_call_operand.vmem [shape: f32[1,32], index: 10, kind: input, shape index: {}]
  %s11 = inlined_call_operand.vmem [shape: f32[1,32], index: 11, kind: input, shape index: {}]
  %s12 = inlined_call_operand.vmem [shape: f32[1,32], index: 12, kind: input, shape index: {}]
  %s13 = inlined_call_operand.vmem [shape: bf16[2,8,32], index: 13, kind: output, shape index: {0}]
  %s14 = inlined_call_operand.hbm [shape: f32[2,8,8], index: 14, kind: output, shape index: {1}]
  %15 = xla_tuple %s13, %s14
  %s16 = sld [smem:[#allocation0]]
  $region70: #{my_transformer_encoder.3} parent=0
    _
  %s18 = ssub.s32 1, %s16
  %s19 = scalar_select 0, %s18, %s16
  $region1: #{my_transformer_encoder.3} parent=0
    #allocation2 [shape = 'u8[8192]{0}', space=vmem, size = 0x2000, scoped, tag = 'output window, operand 1, single buffered']
    #allocation3 [shape = 's32[1]{0}', space=sflag, size = 0x4, scoped, tag = 'scoped memory for my_transformer_encoder.3']
    %20 = vsyncpa [#allocation3], 0
    // Predicated region
    $region2: #{my_transformer_encoder.3} parent=1 // pred_check
      _
    $region3: #{my_transformer_encoder.3} parent=1 // pred_check_branch
      %22 = sbr.rel (0) target = $region5
    $region4: #{my_transformer_encoder.3} parent=1 // pred_region
      _
    $region5: #{my_transformer_encoder.3} parent=1 // pred_fallthru
      _
    // Predicated region
    $region6: #{my_transformer_encoder.3} parent=1 // pred_check
      _
    $region7: #{my_transformer_encoder.3} parent=1 // pred_check_branch
      %24 = sbr.rel (0) target = $region9
    $region8: #{my_transformer_encoder.3} parent=1 // pred_region
      _
    $region9: #{my_transformer_encoder.3} parent=1 // pred_fallthru
      _
    // Predicated region
    $region10: #{my_transformer_encoder.3} parent=1 // pred_check
      _
    $region11: #{my_transformer_encoder.3} parent=1 // pred_check_branch
      %26 = sbr.rel (0) target = $region13
    $region12: #{my_transformer_encoder.3} parent=1 // pred_region
      _
    $region13: #{my_transformer_encoder.3} parent=1 // pred_fallthru
      _
    // Predicated region
    $region14: #{my_transformer_encoder.3} parent=1 // pred_check
      _
    $region15: #{my_transformer_encoder.3} parent=1 // pred_check_branch
      %28 = sbr.rel (0) target = $region17
    $region16: #{my_transformer_encoder.3} parent=1 // pred_region
      _
    $region17: #{my_transformer_encoder.3} parent=1 // pred_fallthru
      _
    // Predicated region
    $region18: #{my_transformer_encoder.3} parent=1 // pred_check
      _
    $region19: #{my_transformer_encoder.3} parent=1 // pred_check_branch
      %30 = sbr.rel (0) target = $region21
    $region20: #{my_transformer_encoder.3} parent=1 // pred_region
      _
    $region21: #{my_transformer_encoder.3} parent=1 // pred_fallthru
      _
    // Predicated region
    $region22: #{my_transformer_encoder.3} parent=1 // pred_check
      _
    $region23: #{my_transformer_encoder.3} parent=1 // pred_check_branch
      %32 = sbr.rel (0) target = $region25
    $region24: #{my_transformer_encoder.3} parent=1 // pred_region
      _
    $region25: #{my_transformer_encoder.3} parent=1 // pred_fallthru
      _
    // Predicated region
    $region26: #{my_transformer_encoder.3} parent=1 // pred_check
      _
    $region27: #{my_transformer_encoder.3} parent=1 // pred_check_branch
      %34 = sbr.rel (0) target = $region29
    $region28: #{my_transformer_encoder.3} parent=1 // pred_region
      _
    $region29: #{my_transformer_encoder.3} parent=1 // pred_fallthru
      _
    // Predicated region
    $region30: #{my_transformer_encoder.3} parent=1 // pred_check
      _
    $region31: #{my_transformer_encoder.3} parent=1 // pred_check_branch
      %36 = sbr.rel (0) target = $region33
    $region32: #{my_transformer_encoder.3} parent=1 // pred_region
      _
    $region33: #{my_transformer_encoder.3} parent=1 // pred_fallthru
      _
    // Predicated region
    $region34: #{my_transformer_encoder.3} parent=1 // pred_check
      _
    $region35: #{my_transformer_encoder.3} parent=1 // pred_check_branch
      %38 = sbr.rel (0) target = $region37
    $region36: #{my_transformer_encoder.3} parent=1 // pred_region
      _
    $region37: #{my_transformer_encoder.3} parent=1 // pred_fallthru
      _
    // Predicated region
    $region38: #{my_transformer_encoder.3} parent=1 // pred_check
      _
    $region39: #{my_transformer_encoder.3} parent=1 // pred_check_branch
      %40 = sbr.rel (0) target = $region41
    $region40: #{my_transformer_encoder.3} parent=1 // pred_region
      _
    $region41: #{my_transformer_encoder.3} parent=1 // pred_fallthru
      _
    // Predicated region
    $region42: #{my_transformer_encoder.3} parent=1 // pred_check
      _
    $region43: #{my_transformer_encoder.3} parent=1 // pred_check_branch
      %42 = sbr.rel (0) target = $region45
    $region44: #{my_transformer_encoder.3} parent=1 // pred_region
      _
    $region45: #{my_transformer_encoder.3} parent=1 // pred_fallthru
      _
    // Predicated region
    $region46: #{my_transformer_encoder.3} parent=1 // pred_check
      _
    $region47: #{my_transformer_encoder.3} parent=1 // pred_check_branch
      %44 = sbr.rel (0) target = $region49
    $region48: #{my_transformer_encoder.3} parent=1 // pred_region
      _
    $region49: #{my_transformer_encoder.3} parent=1 // pred_fallthru
      _
    // Predicated region
    $region50: #{my_transformer_encoder.3} parent=1 // pred_check
      _
    $region51: #{my_transformer_encoder.3} parent=1 // pred_check_branch
      %46 = sbr.rel (0) target = $region53
    $region52: #{my_transformer_encoder.3} parent=1 // pred_region
      _
    $region53: #{my_transformer_encoder.3} parent=1 // pred_fallthru
      _
    %v48 = vld [vmem:[%s0] sm:$0xf]
    %v49 = vld [vmem:[%s0 + $0x4] sm:$0xf]
    %v50 = vunpack.c.l.bf16 %v48
    %v51 = vunpack.c.l.bf16 %v49
    %v52 = vld [vmem:[%s1] sm:$0xf]
    %v53 = vld [vmem:[%s1 + $0x4] sm:$0xf]
    %v54 = vld [vmem:[%s1 + $0x8] sm:$0xf]
    %v55 = vld [vmem:[%s1 + $0xc] sm:$0xf]
    %v56 = vpack.c.bf16 %v51, %v50
    %v57 = vld [vmem:[%s2] sm:$0x1]
    %v59 = vperm.slane %v57, 0
    %v65 = vunpack.c.l.b16 %v52
    %v66 = vunpack.c.l.b16 %v53
    %v67 = vunpack.c.l.b16 %v54
    %v68 = vunpack.c.l.b16 %v55
    %v69 = vpack.c.b16 %v66, %v65
    %v70 = vpack.c.b16 %v68, %v67
    %vm73 = vcmask 261120
    %v75 = vsel %vm73, %v56, 0
    %77 = vmatpush.bf16.msra.mxu0 0
    %78 = vmatpush.bf16.msra.mxu0 0
    %79 = vmatpush.bf16.msra.mxu0 0
    %80 = vmatpush.bf16.msra.mxu0 0
    %81 = vmatpush.bf16.msra.mxu0 0
    %82 = vmatpush.bf16.msra.mxu0 0
    %83 = vmatpush.bf16.msra.mxu0 %v70
    %84 = vmatpush.bf16.msra.mxu0 %v69
    %85 = vmatmul.bf16.gmra.mxu0 %v75
    %v86 = vpop.f32.mrf.mxu0
    %v87 = vadd.f32 %v59, %v86
    %v88 = vpop.f32.mrf.mxu0
    %v89 = vadd.f32 %v59, %v88
    %90 = vdwg.mxu0
    %v91 = vpack.c.bf16 %v87, %v87
    %v92 = vpack.c.bf16 %v89, %v89
    %v94 = vunpack.c.l.b16 %v91
    %v95 = vpack.c.b16 %v94, %v94
    %96 = vrot.lane.b32.xlu0 %v95, 96
    %v97 = vpop.permute.xlu0 %96
    %vm98 = vcmask 64512
    %v100 = vsel %vm98, %v91, 0
    %v103 = vsel %vm98, %v97, 0
    %105 = vmatpush.bf16.xpose.msra.mxu0 0
    %106 = vmatpush.bf16.xpose.msra.mxu0 0
    %107 = vmatpush.bf16.xpose.msra.mxu0 0
    %108 = vmatpush.bf16.xpose.msra.mxu0 0
    %109 = vmatpush.bf16.xpose.msra.mxu0 0
    %110 = vmatpush.bf16.xpose.msra.mxu0 0
    %111 = vmatpush.bf16.xpose.msra.mxu0 0
    %112 = vmatpush.bf16.xpose.msra.mxu0 %v103
    %113 = vmatmul.bf16.gmra.mxu0 %v100
    %v114 = vpop.f32.mrf.mxu0
    %v115 = vadd.f32 0.0, %v114
    %v116 = vpop.f32.mrf.mxu0
    %117 = vdwg.mxu0
    %v119 = vunpack.c.l.b16 %v92
    %v120 = vpack.c.b16 %v119, %v119
    %121 = vrot.lane.b32.xlu0 %v120, 96
    %v122 = vpop.permute.xlu0 %121
    %v124 = vsel %vm98, %v92, 0
    %v127 = vsel %vm98, %v122, 0
    %129 = vmatpush.bf16.xpose.msra.mxu0 0
    %130 = vmatpush.bf16.xpose.msra.mxu0 0
    %131 = vmatpush.bf16.xpose.msra.mxu0 0
    %132 = vmatpush.bf16.xpose.msra.mxu0 0
    %133 = vmatpush.bf16.xpose.msra.mxu0 0
    %134 = vmatpush.bf16.xpose.msra.mxu0 0
    %135 = vmatpush.bf16.xpose.msra.mxu0 0
    %136 = vmatpush.bf16.xpose.msra.mxu0 %v127
    %137 = vmatmul.bf16.gmra.mxu0 %v124
    %v138 = vpop.f32.mrf.mxu0
    %v139 = vadd.f32 0.0, %v138
    %v140 = vpop.f32.mrf.mxu0
    %141 = vdwg.mxu0
    %v142 = vsel %vm98, %v115, -inf
    %143 = vmax.xlane.f32.xlu0 %v142
    %v144 = vpop.xlane.xlu0 %143
    %v145 = vsel %vm98, %v139, -inf
    %146 = vmax.xlane.f32.xlu0 %v145
    %v147 = vpop.xlane.xlu0 %146
    %v148 = vsub.f32 %v115, %v144
    %v149 = vsub.f32 %v139, %v147
    %v150 = vmul.f32 %v148, 1.442695
    %v151 = vpow.pop %v150
    %v152 = vmul.f32 %v149, 1.442695
    %v153 = vpow.pop %v152
    %v154 = vsel %vm98, %v151, 0.0
    %155 = vadd.xlane.f32.xlu0 %v154
    %v156 = vpop.xlane.xlu0 %155
    %v157 = vsel %vm98, %v153, 0.0
    %158 = vadd.xlane.f32.xlu0 %v157
    %v159 = vpop.xlane.xlu0 %158
    %v160 = vrcp.pop %v156
    %v161 = vmul.f32 %v156, %v160
    %v162 = vsub.f32 1.0, %v161
    %v163 = vmul.f32 %v160, %v162
    %v164 = vadd.f32 %v160, %v163
    %vm165 = vweird.f32 %v156
    %vm166 = vweird.f32 %v160
    %vm167 = vmor %vm165, %vm166
    %v168 = vsel %vm167, %v160, %v164
    %v169 = vand.u32 2147483647, %v156
    %vm170 = vcmp.eq.f32.partialorder %v169, 8.507059e+37
    %v171 = vand.u32 %v156, 2147483648
    %v172 = vor.u32 1.1754944e-38, %v171
    %v173 = vsel %vm170, %v172, %v168
    %v174 = vmul.f32 %v151, %v173
    %v175 = vrcp.pop %v159
    %v176 = vmul.f32 %v159, %v175
    %v177 = vsub.f32 1.0, %v176
    %v178 = vmul.f32 %v175, %v177
    %v179 = vadd.f32 %v175, %v178
    %vm180 = vweird.f32 %v159
    %vm181 = vweird.f32 %v175
    %vm182 = vmor %vm180, %vm181
    %v183 = vsel %vm182, %v175, %v179
    %v184 = vand.u32 2147483647, %v159
    %vm185 = vcmp.eq.f32.partialorder %v184, 8.507059e+37
    %v186 = vand.u32 %v159, 2147483648
    %v187 = vor.u32 1.1754944e-38, %v186
    %v188 = vsel %vm185, %v187, %v183
    %v189 = vmul.f32 %v153, %v188
    %v190 = vadd.f32 %v174, 0.0
    %v191 = vadd.f32 %v189, 0.0
    %v192 = vpack.c.bf16 %v174, %v174
    %v193 = vpack.c.bf16 %v189, %v189
    %194 = vrot.lane.b32.xlu0 %v95, 64
    %v195 = vpop.permute.xlu0 %194
    %v197 = vsel %vm98, %v192, 0
    %vm199 = vcmask 1043456
    %v201 = vsel %vm199, %v195, 0
    %203 = vmatpush.bf16.msra.mxu0 0
    %204 = vmatpush.bf16.msra.mxu0 0
    %205 = vmatpush.bf16.msra.mxu0 0
    %206 = vmatpush.bf16.msra.mxu0 0
    %207 = vmatpush.bf16.msra.mxu0 0
    %208 = vmatpush.bf16.msra.mxu0 0
    %209 = vmatpush.bf16.msra.mxu0 0
    %210 = vmatpush.bf16.msra.mxu0 %v201
    %211 = vmatmul.bf16.gmra.mxu0 %v197
    %v212 = vpop.f32.mrf.mxu0
    %v213 = vadd.f32 0.0, %v212
    %v214 = vpop.f32.mrf.mxu0
    %215 = vdwg.mxu0
    %216 = vrot.lane.b32.xlu0 %v120, 64
    %v217 = vpop.permute.xlu0 %216
    %v219 = vsel %vm98, %v193, 0
    %v222 = vsel %vm199, %v217, 0
    %224 = vmatpush.bf16.msra.mxu0 0
    %225 = vmatpush.bf16.msra.mxu0 0
    %226 = vmatpush.bf16.msra.mxu0 0
    %227 = vmatpush.bf16.msra.mxu0 0
    %228 = vmatpush.bf16.msra.mxu0 0
    %229 = vmatpush.bf16.msra.mxu0 0
    %230 = vmatpush.bf16.msra.mxu0 0
    %231 = vmatpush.bf16.msra.mxu0 %v222
    %232 = vmatmul.bf16.gmra.mxu0 %v219
    %v233 = vpop.f32.mrf.mxu0
    %v234 = vadd.f32 0.0, %v233
    %v235 = vpop.f32.mrf.mxu0
    %236 = vdwg.mxu0
    %v237 = vld [vmem:[%s3] sm:$0xf]
    %v238 = vpack.c.bf16 %v234, %v213
    %239 = vrot.lane.b32.xlu0 %v95, 120
    %v240 = vpop.permute.xlu0 %239
    %241 = vrot.lane.b32.xlu0 %v95, 88
    %v242 = vpop.permute.xlu0 %241
    %v244 = vsel %vm98, %v240, 0
    %v247 = vsel %vm98, %v242, 0
    %249 = vmatpush.bf16.xpose.msra.mxu0 0
    %250 = vmatpush.bf16.xpose.msra.mxu0 0
    %251 = vmatpush.bf16.xpose.msra.mxu0 0
    %252 = vmatpush.bf16.xpose.msra.mxu0 0
    %253 = vmatpush.bf16.xpose.msra.mxu0 0
    %254 = vmatpush.bf16.xpose.msra.mxu0 0
    %255 = vmatpush.bf16.xpose.msra.mxu0 0
    %256 = vmatpush.bf16.xpose.msra.mxu0 %v247
    %257 = vmatmul.bf16.gmra.mxu0 %v244
    %v258 = vpop.f32.mrf.mxu0
    %v259 = vadd.f32 0.0, %v258
    %v260 = vpop.f32.mrf.mxu0
    %261 = vdwg.mxu0
    %262 = vrot.lane.b32.xlu0 %v120, 120
    %v263 = vpop.permute.xlu0 %262
    %264 = vrot.lane.b32.xlu0 %v120, 88
    %v265 = vpop.permute.xlu0 %264
    %v267 = vsel %vm98, %v263, 0
    %v270 = vsel %vm98, %v265, 0
    %272 = vmatpush.bf16.xpose.msra.mxu0 0
    %273 = vmatpush.bf16.xpose.msra.mxu0 0
    %274 = vmatpush.bf16.xpose.msra.mxu0 0
    %275 = vmatpush.bf16.xpose.msra.mxu0 0
    %276 = vmatpush.bf16.xpose.msra.mxu0 0
    %277 = vmatpush.bf16.xpose.msra.mxu0 0
    %278 = vmatpush.bf16.xpose.msra.mxu0 0
    %279 = vmatpush.bf16.xpose.msra.mxu0 %v270
    %280 = vmatmul.bf16.gmra.mxu0 %v267
    %v281 = vpop.f32.mrf.mxu0
    %v282 = vadd.f32 0.0, %v281
    %v283 = vpop.f32.mrf.mxu0
    %284 = vdwg.mxu0
    %v285 = vsel %vm98, %v259, -inf
    %286 = vmax.xlane.f32.xlu0 %v285
    %v287 = vpop.xlane.xlu0 %286
    %v288 = vsel %vm98, %v282, -inf
    %289 = vmax.xlane.f32.xlu0 %v288
    %v290 = vpop.xlane.xlu0 %289
    %v291 = vsub.f32 %v259, %v287
    %v292 = vsub.f32 %v282, %v290
    %v293 = vmul.f32 %v291, 1.442695
    %v294 = vpow.pop %v293
    %v295 = vmul.f32 %v292, 1.442695
    %v296 = vpow.pop %v295
    %v297 = vsel %vm98, %v294, 0.0
    %298 = vadd.xlane.f32.xlu0 %v297
    %v299 = vpop.xlane.xlu0 %298
    %v300 = vsel %vm98, %v296, 0.0
    %301 = vadd.xlane.f32.xlu0 %v300
    %v302 = vpop.xlane.xlu0 %301
    %v303 = vrcp.pop %v299
    %v304 = vmul.f32 %v299, %v303
    %v305 = vsub.f32 1.0, %v304
    %v306 = vmul.f32 %v303, %v305
    %v307 = vadd.f32 %v303, %v306
    %vm308 = vweird.f32 %v299
    %vm309 = vweird.f32 %v303
    %vm310 = vmor %vm308, %vm309
    %v311 = vsel %vm310, %v303, %v307
    %v312 = vand.u32 2147483647, %v299
    %vm313 = vcmp.eq.f32.partialorder %v312, 8.507059e+37
    %v314 = vand.u32 %v299, 2147483648
    %v315 = vor.u32 1.1754944e-38, %v314
    %v316 = vsel %vm313, %v315, %v311
    %v317 = vmul.f32 %v294, %v316
    %v318 = vrcp.pop %v302
    %v319 = vmul.f32 %v302, %v318
    %v320 = vsub.f32 1.0, %v319
    %v321 = vmul.f32 %v318, %v320
    %v322 = vadd.f32 %v318, %v321
    %vm323 = vweird.f32 %v302
    %vm324 = vweird.f32 %v318
    %vm325 = vmor %vm323, %vm324
    %v326 = vsel %vm325, %v318, %v322
    %v327 = vand.u32 2147483647, %v302
    %vm328 = vcmp.eq.f32.partialorder %v327, 8.507059e+37
    %v329 = vand.u32 %v302, 2147483648
    %v330 = vor.u32 1.1754944e-38, %v329
    %v331 = vsel %vm328, %v330, %v326
    %v332 = vmul.f32 %v296, %v331
    %v333 = vadd.f32 %v190, %v317
    %v334 = vadd.f32 %v191, %v332
    %v335 = vpack.c.bf16 %v317, %v317
    %v336 = vpack.c.bf16 %v332, %v332
    %337 = vrot.lane.b32.xlu0 %v95, 56
    %v338 = vpop.permute.xlu0 %337
    %v340 = vsel %vm98, %v335, 0
    %v343 = vsel %vm199, %v338, 0
    %345 = vmatpush.bf16.msra.mxu0 0
    %346 = vmatpush.bf16.msra.mxu0 0
    %347 = vmatpush.bf16.msra.mxu0 0
    %348 = vmatpush.bf16.msra.mxu0 0
    %349 = vmatpush.bf16.msra.mxu0 0
    %350 = vmatpush.bf16.msra.mxu0 0
    %351 = vmatpush.bf16.msra.mxu0 0
    %352 = vmatpush.bf16.msra.mxu0 %v343
    %353 = vmatmul.bf16.gmra.mxu0 %v340
    %v354 = vpop.f32.mrf.mxu0
    %v355 = vadd.f32 0.0, %v354
    %v356 = vpop.f32.mrf.mxu0
    %357 = vdwg.mxu0
    %358 = vrot.lane.b32.xlu0 %v120, 56
    %v359 = vpop.permute.xlu0 %358
    %v361 = vsel %vm98, %v336, 0
    %v364 = vsel %vm199, %v359, 0
    %366 = vmatpush.bf16.msra.mxu0 0
    %367 = vmatpush.bf16.msra.mxu0 0
    %368 = vmatpush.bf16.msra.mxu0 0
    %369 = vmatpush.bf16.msra.mxu0 0
    %370 = vmatpush.bf16.msra.mxu0 0
    %371 = vmatpush.bf16.msra.mxu0 0
    %372 = vmatpush.bf16.msra.mxu0 0
    %373 = vmatpush.bf16.msra.mxu0 %v364
    %374 = vmatmul.bf16.gmra.mxu0 %v361
    %v375 = vpop.f32.mrf.mxu0
    %v376 = vadd.f32 0.0, %v375
    %v377 = vpop.f32.mrf.mxu0
    %378 = vdwg.mxu0
    %v379 = vld [vmem:[%s3 + $0x4] sm:$0xf]
    %v380 = vpack.c.bf16 %v376, %v355
    %v382 = vsel %vm98, %v380, 0
    %v385 = vsel %vm199, %v379, 0
    %387 = vmatpush.bf16.msra.mxu0 0
    %388 = vmatpush.bf16.msra.mxu0 0
    %389 = vmatpush.bf16.msra.mxu0 0
    %390 = vmatpush.bf16.msra.mxu0 0
    %391 = vmatpush.bf16.msra.mxu0 0
    %392 = vmatpush.bf16.msra.mxu0 0
    %393 = vmatpush.bf16.msra.mxu0 0
    %394 = vmatpush.bf16.msra.mxu0 %v385
    %395 = vmatmul.bf16.gmra.mxu0 %v382
    %v396 = vpop.f32.mrf.mxu0
    %v397 = vadd.f32 0.0, %v396
    %v398 = vpop.f32.mrf.mxu0
    %v399 = vadd.f32 0.0, %v398
    %400 = vdwg.mxu0
    %v402 = vsel %vm98, %v238, 0
    %v405 = vsel %vm199, %v237, 0
    %407 = vmatpush.bf16.msra.mxu0 0
    %408 = vmatpush.bf16.msra.mxu0 0
    %409 = vmatpush.bf16.msra.mxu0 0
    %410 = vmatpush.bf16.msra.mxu0 0
    %411 = vmatpush.bf16.msra.mxu0 0
    %412 = vmatpush.bf16.msra.mxu0 0
    %413 = vmatpush.bf16.msra.mxu0 0
    %414 = vmatpush.bf16.msra.mxu0 %v405
    %415 = vmatmul.bf16.gmra.mxu0 %v402
    %v416 = vpop.f32.mrf.mxu0
    %v417 = vadd.f32 %v397, %v416
    %v418 = vpop.f32.mrf.mxu0
    %v419 = vadd.f32 %v399, %v418
    %420 = vdwg.mxu0
    %421 = vrot.lane.b32.xlu0 %v95, 112
    %v422 = vpop.permute.xlu0 %421
    %423 = vrot.lane.b32.xlu0 %v95, 80
    %v424 = vpop.permute.xlu0 %423
    %v426 = vsel %vm98, %v422, 0
    %v429 = vsel %vm98, %v424, 0
    %431 = vmatpush.bf16.xpose.msra.mxu0 0
    %432 = vmatpush.bf16.xpose.msra.mxu0 0
    %433 = vmatpush.bf16.xpose.msra.mxu0 0
    %434 = vmatpush.bf16.xpose.msra.mxu0 0
    %435 = vmatpush.bf16.xpose.msra.mxu0 0
    %436 = vmatpush.bf16.xpose.msra.mxu0 0
    %437 = vmatpush.bf16.xpose.msra.mxu0 0
    %438 = vmatpush.bf16.xpose.msra.mxu0 %v429
    %439 = vmatmul.bf16.gmra.mxu0 %v426
    %v440 = vpop.f32.mrf.mxu0
    %v441 = vadd.f32 0.0, %v440
    %v442 = vpop.f32.mrf.mxu0
    %443 = vdwg.mxu0
    %444 = vrot.lane.b32.xlu0 %v120, 112
    %v445 = vpop.permute.xlu0 %444
    %446 = vrot.lane.b32.xlu0 %v120, 80
    %v447 = vpop.permute.xlu0 %446
    %v449 = vsel %vm98, %v445, 0
    %v452 = vsel %vm98, %v447, 0
    %454 = vmatpush.bf16.xpose.msra.mxu0 0
    %455 = vmatpush.bf16.xpose.msra.mxu0 0
    %456 = vmatpush.bf16.xpose.msra.mxu0 0
    %457 = vmatpush.bf16.xpose.msra.mxu0 0
    %458 = vmatpush.bf16.xpose.msra.mxu0 0
    %459 = vmatpush.bf16.xpose.msra.mxu0 0
    %460 = vmatpush.bf16.xpose.msra.mxu0 0
    %461 = vmatpush.bf16.xpose.msra.mxu0 %v452
    %462 = vmatmul.bf16.gmra.mxu0 %v449
    %v463 = vpop.f32.mrf.mxu0
    %v464 = vadd.f32 0.0, %v463
    %v465 = vpop.f32.mrf.mxu0
    %466 = vdwg.mxu0
    %v467 = vsel %vm98, %v441, -inf
    %468 = vmax.xlane.f32.xlu0 %v467
    %v469 = vpop.xlane.xlu0 %468
    %v470 = vsel %vm98, %v464, -inf
    %471 = vmax.xlane.f32.xlu0 %v470
    %v472 = vpop.xlane.xlu0 %471
    %v473 = vsub.f32 %v441, %v469
    %v474 = vsub.f32 %v464, %v472
    %v475 = vmul.f32 %v473, 1.442695
    %v476 = vpow.pop %v475
    %v477 = vmul.f32 %v474, 1.442695
    %v478 = vpow.pop %v477
    %v479 = vsel %vm98, %v476, 0.0
    %480 = vadd.xlane.f32.xlu0 %v479
    %v481 = vpop.xlane.xlu0 %480
    %v482 = vsel %vm98, %v478, 0.0
    %483 = vadd.xlane.f32.xlu0 %v482
    %v484 = vpop.xlane.xlu0 %483
    %v485 = vrcp.pop %v481
    %v486 = vmul.f32 %v481, %v485
    %v487 = vsub.f32 1.0, %v486
    %v488 = vmul.f32 %v485, %v487
    %v489 = vadd.f32 %v485, %v488
    %vm490 = vweird.f32 %v481
    %vm491 = vweird.f32 %v485
    %vm492 = vmor %vm490, %vm491
    %v493 = vsel %vm492, %v485, %v489
    %v494 = vand.u32 2147483647, %v481
    %vm495 = vcmp.eq.f32.partialorder %v494, 8.507059e+37
    %v496 = vand.u32 %v481, 2147483648
    %v497 = vor.u32 1.1754944e-38, %v496
    %v498 = vsel %vm495, %v497, %v493
    %v499 = vmul.f32 %v476, %v498
    %v500 = vrcp.pop %v484
    %v501 = vmul.f32 %v484, %v500
    %v502 = vsub.f32 1.0, %v501
    %v503 = vmul.f32 %v500, %v502
    %v504 = vadd.f32 %v500, %v503
    %vm505 = vweird.f32 %v484
    %vm506 = vweird.f32 %v500
    %vm507 = vmor %vm505, %vm506
    %v508 = vsel %vm507, %v500, %v504
    %v509 = vand.u32 2147483647, %v484
    %vm510 = vcmp.eq.f32.partialorder %v509, 8.507059e+37
    %v511 = vand.u32 %v484, 2147483648
    %v512 = vor.u32 1.1754944e-38, %v511
    %v513 = vsel %vm510, %v512, %v508
    %v514 = vmul.f32 %v478, %v513
    %v515 = vadd.f32 %v333, %v499
    %v516 = vadd.f32 %v334, %v514
    %v517 = vpack.c.bf16 %v499, %v499
    %v518 = vpack.c.bf16 %v514, %v514
    %519 = vrot.lane.b32.xlu0 %v95, 48
    %v520 = vpop.permute.xlu0 %519
    %v522 = vsel %vm98, %v517, 0
    %v525 = vsel %vm199, %v520, 0
    %527 = vmatpush.bf16.msra.mxu0 0
    %528 = vmatpush.bf16.msra.mxu0 0
    %529 = vmatpush.bf16.msra.mxu0 0
    %530 = vmatpush.bf16.msra.mxu0 0
    %531 = vmatpush.bf16.msra.mxu0 0
    %532 = vmatpush.bf16.msra.mxu0 0
    %533 = vmatpush.bf16.msra.mxu0 0
    %534 = vmatpush.bf16.msra.mxu0 %v525
    %535 = vmatmul.bf16.gmra.mxu0 %v522
    %v536 = vpop.f32.mrf.mxu0
    %v537 = vadd.f32 0.0, %v536
    %v538 = vpop.f32.mrf.mxu0
    %539 = vdwg.mxu0
    %540 = vrot.lane.b32.xlu0 %v120, 48
    %v541 = vpop.permute.xlu0 %540
    %v543 = vsel %vm98, %v518, 0
    %v546 = vsel %vm199, %v541, 0
    %548 = vmatpush.bf16.msra.mxu0 0
    %549 = vmatpush.bf16.msra.mxu0 0
    %550 = vmatpush.bf16.msra.mxu0 0
    %551 = vmatpush.bf16.msra.mxu0 0
    %552 = vmatpush.bf16.msra.mxu0 0
    %553 = vmatpush.bf16.msra.mxu0 0
    %554 = vmatpush.bf16.msra.mxu0 0
    %555 = vmatpush.bf16.msra.mxu0 %v546
    %556 = vmatmul.bf16.gmra.mxu0 %v543
    %v557 = vpop.f32.mrf.mxu0
    %v558 = vadd.f32 0.0, %v557
    %v559 = vpop.f32.mrf.mxu0
    %560 = vdwg.mxu0
    %v561 = vld [vmem:[%s3 + $0x8] sm:$0xf]
    %v562 = vpack.c.bf16 %v558, %v537
    %v564 = vsel %vm98, %v562, 0
    %v567 = vsel %vm199, %v561, 0
    %569 = vmatpush.bf16.msra.mxu0 0
    %570 = vmatpush.bf16.msra.mxu0 0
    %571 = vmatpush.bf16.msra.mxu0 0
    %572 = vmatpush.bf16.msra.mxu0 0
    %573 = vmatpush.bf16.msra.mxu0 0
    %574 = vmatpush.bf16.msra.mxu0 0
    %575 = vmatpush.bf16.msra.mxu0 0
    %576 = vmatpush.bf16.msra.mxu0 %v567
    %577 = vmatmul.bf16.gmra.mxu0 %v564
    %v578 = vpop.f32.mrf.mxu0
    %v579 = vadd.f32 0.0, %v578
    %v580 = vpop.f32.mrf.mxu0
    %v581 = vadd.f32 0.0, %v580
    %582 = vdwg.mxu0
    %v583 = vadd.f32 %v417, %v579
    %v584 = vadd.f32 %v419, %v581
    %585 = vrot.lane.b32.xlu0 %v95, 104
    %v586 = vpop.permute.xlu0 %585
    %587 = vrot.lane.b32.xlu0 %v95, 72
    %v588 = vpop.permute.xlu0 %587
    %v590 = vsel %vm98, %v586, 0
    %v593 = vsel %vm98, %v588, 0
    %595 = vmatpush.bf16.xpose.msra.mxu0 0
    %596 = vmatpush.bf16.xpose.msra.mxu0 0
    %597 = vmatpush.bf16.xpose.msra.mxu0 0
    %598 = vmatpush.bf16.xpose.msra.mxu0 0
    %599 = vmatpush.bf16.xpose.msra.mxu0 0
    %600 = vmatpush.bf16.xpose.msra.mxu0 0
    %601 = vmatpush.bf16.xpose.msra.mxu0 0
    %602 = vmatpush.bf16.xpose.msra.mxu0 %v593
    %603 = vmatmul.bf16.gmra.mxu0 %v590
    %v604 = vpop.f32.mrf.mxu0
    %v605 = vadd.f32 0.0, %v604
    %v606 = vpop.f32.mrf.mxu0
    %607 = vdwg.mxu0
    %608 = vrot.lane.b32.xlu0 %v120, 104
    %v609 = vpop.permute.xlu0 %608
    %610 = vrot.lane.b32.xlu0 %v120, 72
    %v611 = vpop.permute.xlu0 %610
    %v613 = vsel %vm98, %v609, 0
    %v616 = vsel %vm98, %v611, 0
    %618 = vmatpush.bf16.xpose.msra.mxu0 0
    %619 = vmatpush.bf16.xpose.msra.mxu0 0
    %620 = vmatpush.bf16.xpose.msra.mxu0 0
    %621 = vmatpush.bf16.xpose.msra.mxu0 0
    %622 = vmatpush.bf16.xpose.msra.mxu0 0
    %623 = vmatpush.bf16.xpose.msra.mxu0 0
    %624 = vmatpush.bf16.xpose.msra.mxu0 0
    %625 = vmatpush.bf16.xpose.msra.mxu0 %v616
    %626 = vmatmul.bf16.gmra.mxu0 %v613
    %v627 = vpop.f32.mrf.mxu0
    %v628 = vadd.f32 0.0, %v627
    %v629 = vpop.f32.mrf.mxu0
    %630 = vdwg.mxu0
    %v631 = vsel %vm98, %v605, -inf
    %632 = vmax.xlane.f32.xlu0 %v631
    %v633 = vpop.xlane.xlu0 %632
    %v634 = vsel %vm98, %v628, -inf
    %635 = vmax.xlane.f32.xlu0 %v634
    %v636 = vpop.xlane.xlu0 %635
    %v637 = vsub.f32 %v605, %v633
    %v638 = vsub.f32 %v628, %v636
    %v639 = vmul.f32 %v637, 1.442695
    %v640 = vpow.pop %v639
    %v641 = vmul.f32 %v638, 1.442695
    %v642 = vpow.pop %v641
    %v643 = vsel %vm98, %v640, 0.0
    %644 = vadd.xlane.f32.xlu0 %v643
    %v645 = vpop.xlane.xlu0 %644
    %v646 = vsel %vm98, %v642, 0.0
    %647 = vadd.xlane.f32.xlu0 %v646
    %v648 = vpop.xlane.xlu0 %647
    %v649 = vrcp.pop %v645
    %v650 = vmul.f32 %v645, %v649
    %v651 = vsub.f32 1.0, %v650
    %v652 = vmul.f32 %v649, %v651
    %v653 = vadd.f32 %v649, %v652
    %vm654 = vweird.f32 %v645
    %vm655 = vweird.f32 %v649
    %vm656 = vmor %vm654, %vm655
    %v657 = vsel %vm656, %v649, %v653
    %v658 = vand.u32 2147483647, %v645
    %vm659 = vcmp.eq.f32.partialorder %v658, 8.507059e+37
    %v660 = vand.u32 %v645, 2147483648
    %v661 = vor.u32 1.1754944e-38, %v660
    %v662 = vsel %vm659, %v661, %v657
    %v663 = vmul.f32 %v640, %v662
    %v664 = vrcp.pop %v648
    %v665 = vmul.f32 %v648, %v664
    %v666 = vsub.f32 1.0, %v665
    %v667 = vmul.f32 %v664, %v666
    %v668 = vadd.f32 %v664, %v667
    %vm669 = vweird.f32 %v648
    %vm670 = vweird.f32 %v664
    %vm671 = vmor %vm669, %vm670
    %v672 = vsel %vm671, %v664, %v668
    %v673 = vand.u32 2147483647, %v648
    %vm674 = vcmp.eq.f32.partialorder %v673, 8.507059e+37
    %v675 = vand.u32 %v648, 2147483648
    %v676 = vor.u32 1.1754944e-38, %v675
    %v677 = vsel %vm674, %v676, %v672
    %v678 = vmul.f32 %v642, %v677
    %v679 = vadd.f32 %v515, %v663
    %v680 = vadd.f32 %v516, %v678
    %v681 = vpack.c.bf16 %v663, %v663
    %v682 = vpack.c.bf16 %v678, %v678
    %683 = vrot.lane.b32.xlu0 %v95, 40
    %v684 = vpop.permute.xlu0 %683
    %v686 = vsel %vm98, %v681, 0
    %v689 = vsel %vm199, %v684, 0
    %691 = vmatpush.bf16.msra.mxu0 0
    %692 = vmatpush.bf16.msra.mxu0 0
    %693 = vmatpush.bf16.msra.mxu0 0
    %694 = vmatpush.bf16.msra.mxu0 0
    %695 = vmatpush.bf16.msra.mxu0 0
    %696 = vmatpush.bf16.msra.mxu0 0
    %697 = vmatpush.bf16.msra.mxu0 0
    %698 = vmatpush.bf16.msra.mxu0 %v689
    %699 = vmatmul.bf16.gmra.mxu0 %v686
    %v700 = vpop.f32.mrf.mxu0
    %v701 = vadd.f32 0.0, %v700
    %v702 = vpop.f32.mrf.mxu0
    %703 = vdwg.mxu0
    %704 = vrot.lane.b32.xlu0 %v120, 40
    %v705 = vpop.permute.xlu0 %704
    %v707 = vsel %vm98, %v682, 0
    %v710 = vsel %vm199, %v705, 0
    %712 = vmatpush.bf16.msra.mxu0 0
    %713 = vmatpush.bf16.msra.mxu0 0
    %714 = vmatpush.bf16.msra.mxu0 0
    %715 = vmatpush.bf16.msra.mxu0 0
    %716 = vmatpush.bf16.msra.mxu0 0
    %717 = vmatpush.bf16.msra.mxu0 0
    %718 = vmatpush.bf16.msra.mxu0 0
    %719 = vmatpush.bf16.msra.mxu0 %v710
    %720 = vmatmul.bf16.gmra.mxu0 %v707
    %v721 = vpop.f32.mrf.mxu0
    %v722 = vadd.f32 0.0, %v721
    %v723 = vpop.f32.mrf.mxu0
    %724 = vdwg.mxu0
    %v725 = vld [vmem:[%s3 + $0xc] sm:$0xf]
    %v726 = vpack.c.bf16 %v722, %v701
    %v728 = vsel %vm98, %v726, 0
    %v731 = vsel %vm199, %v725, 0
    %733 = vmatpush.bf16.msra.mxu0 0
    %734 = vmatpush.bf16.msra.mxu0 0
    %735 = vmatpush.bf16.msra.mxu0 0
    %736 = vmatpush.bf16.msra.mxu0 0
    %737 = vmatpush.bf16.msra.mxu0 0
    %738 = vmatpush.bf16.msra.mxu0 0
    %739 = vmatpush.bf16.msra.mxu0 0
    %740 = vmatpush.bf16.msra.mxu0 %v731
    %741 = vmatmul.bf16.gmra.mxu0 %v728
    %v742 = vpop.f32.mrf.mxu0
    %v743 = vadd.f32 0.0, %v742
    %v744 = vpop.f32.mrf.mxu0
    %v745 = vadd.f32 0.0, %v744
    %746 = vdwg.mxu0
    %v747 = vadd.f32 %v583, %v743
    %v748 = vadd.f32 %v584, %v745
    %v749 = vmul.f32 %v679, 0.25
    %v750 = vmul.f32 %v680, 0.25
    %751 = vst.msk [vmem:[#allocation2] sm:$0xff] %vm98, %v749
    %752 = vst.msk [vmem:[#allocation2 + $0x8] sm:$0xff] %vm98, %v750
    %v753 = vld [vmem:[%s4] sm:$0x1]
    %v755 = vperm.slane %v753, 0
    %v757 = vadd.f32 %v747, %v755
    %v758 = vadd.f32 %v748, %v755
    %v759 = vld [vmem:[%s5] sm:$0x1]
    %v760 = vld [vmem:[%s6] sm:$0x1]
    %v761 = vadd.f32 %v50, %v757
    %v762 = vadd.f32 %v51, %v758
    %v763 = vsel %vm73, %v761, 0.0
    %764 = vadd.xlane.f32.xlu0 %v763
    %v765 = vpop.xlane.xlu0 %764
    %v766 = vsel %vm73, %v762, 0.0
    %767 = vadd.xlane.f32.xlu0 %v766
    %v768 = vpop.xlane.xlu0 %767
    %v769 = vrcp.pop 32.0
    %v770 = vmul.f32 32.0, %v769
    %v771 = vsub.f32 1.0, %v770
    %v772 = vmul.f32 %v769, %v771
    %v773 = vadd.f32 %v769, %v772
    %vm774 = vweird.f32 %v769
    %v775 = vsel %vm774, %v769, %v773
    %v776 = vmul.f32 %v765, %v775
    %v777 = vmul.f32 %v768, %v775
    %v778 = vsub.f32 %v761, %v776
    %v779 = vsub.f32 %v762, %v777
    %v780 = vmul.f32 %v778, %v778
    %v781 = vmul.f32 %v779, %v779
    %v782 = vsel %vm73, %v780, 0.0
    %783 = vadd.xlane.f32.xlu0 %v782
    %v784 = vpop.xlane.xlu0 %783
    %v785 = vsel %vm73, %v781, 0.0
    %786 = vadd.xlane.f32.xlu0 %v785
    %v787 = vpop.xlane.xlu0 %786
    %v788 = vmul.f32 %v784, %v775
    %v789 = vmul.f32 %v787, %v775
    %v790 = vadd.f32 %v788, 1e-05
    %v791 = vadd.f32 %v789, 1e-05
    %v792 = vrsqrt.pop %v790
    %v793 = vmul.f32 %v792, %v790
    %v794 = vmul.f32 %v793, %v792
    %v795 = vmul.f32 0.5, %v794
    %v796 = vsub.f32 1.5, %v795
    %v797 = vmul.f32 %v792, %v796
    %vm798 = vweird.f32 %v790
    %vm799 = vweird.f32 %v792
    %vm800 = vmor %vm798, %vm799
    %v801 = vsel %vm800, %v792, %v797
    %v802 = vrsqrt.pop %v791
    %v803 = vmul.f32 %v802, %v791
    %v804 = vmul.f32 %v803, %v802
    %v805 = vmul.f32 0.5, %v804
    %v806 = vsub.f32 1.5, %v805
    %v807 = vmul.f32 %v802, %v806
    %vm808 = vweird.f32 %v791
    %vm809 = vweird.f32 %v802
    %vm810 = vmor %vm808, %vm809
    %v811 = vsel %vm810, %v802, %v807
    %v812 = vmul.f32 %v778, %v801
    %v813 = vmul.f32 %v779, %v811
    %v815 = vperm.slane %v759, 0
    %v817 = vmul.f32 %v812, %v815
    %v818 = vmul.f32 %v813, %v815
    %v820 = vperm.slane %v760, 0
    %v822 = vadd.f32 %v817, %v820
    %v823 = vadd.f32 %v818, %v820
    %v824 = vld [vmem:[%s7] sm:$0xf]
    %v825 = vld [vmem:[%s7 + $0x4] sm:$0xf]
    %v826 = vld [vmem:[%s7 + $0x8] sm:$0xf]
    %v827 = vld [vmem:[%s7 + $0xc] sm:$0xf]
    %v828 = vpack.c.bf16 %v823, %v822
    %v829 = vld [vmem:[%s8] sm:$0x1]
    %v831 = vperm.slane %v829, 0
    %v837 = vunpack.c.l.b16 %v824
    %v838 = vunpack.c.l.b16 %v825
    %v839 = vunpack.c.l.b16 %v826
    %v840 = vunpack.c.l.b16 %v827
    %v841 = vpack.c.b16 %v838, %v837
    %v842 = vpack.c.b16 %v840, %v839
    %v846 = vsel %vm73, %v828, 0
    %848 = vmatpush.bf16.msra.mxu0 0
    %849 = vmatpush.bf16.msra.mxu0 0
    %850 = vmatpush.bf16.msra.mxu0 0
    %851 = vmatpush.bf16.msra.mxu0 0
    %852 = vmatpush.bf16.msra.mxu0 0
    %853 = vmatpush.bf16.msra.mxu0 0
    %854 = vmatpush.bf16.msra.mxu0 %v842
    %855 = vmatpush.bf16.msra.mxu0 %v841
    %856 = vmatmul.bf16.gmra.mxu0 %v846
    %v857 = vpop.f32.mrf.mxu0
    %v858 = vadd.f32 %v831, %v857
    %v859 = vpop.f32.mrf.mxu0
    %v860 = vadd.f32 %v831, %v859
    %861 = vdwg.mxu0
    %v862 = vmax.f32 %v858, 0.0
    %v863 = vmax.f32 %v860, 0.0
    %v864 = vld [vmem:[%s9] sm:$0xf]
    %v865 = vld [vmem:[%s9 + $0x4] sm:$0xf]
    %v866 = vld [vmem:[%s9 + $0x8] sm:$0xf]
    %v867 = vld [vmem:[%s9 + $0xc] sm:$0xf]
    %v868 = vld [vmem:[%s9 + $0x10] sm:$0xf]
    %v869 = vld [vmem:[%s9 + $0x14] sm:$0xf]
    %v870 = vld [vmem:[%s9 + $0x18] sm:$0xf]
    %v871 = vld [vmem:[%s9 + $0x1c] sm:$0xf]
    %v872 = vpack.c.bf16 %v863, %v862
    %v873 = vld [vmem:[%s10] sm:$0x1]
    %v875 = vperm.slane %v873, 0
    %v885 = vunpack.c.l.b16 %v864
    %v886 = vunpack.c.l.b16 %v865
    %v887 = vunpack.c.l.b16 %v866
    %v888 = vunpack.c.l.b16 %v867
    %v889 = vunpack.c.l.b16 %v868
    %v890 = vunpack.c.l.b16 %v869
    %v891 = vunpack.c.l.b16 %v870
    %v892 = vunpack.c.l.b16 %v871
    %v893 = vpack.c.b16 %v886, %v885
    %v894 = vpack.c.b16 %v888, %v887
    %v895 = vpack.c.b16 %v890, %v889
    %v896 = vpack.c.b16 %v892, %v891
    %vm901 = vcmask 523264
    %v903 = vsel %vm901, %v872, 0
    %905 = vmatpush.bf16.msra.mxu0 0
    %906 = vmatpush.bf16.msra.mxu0 0
    %907 = vmatpush.bf16.msra.mxu0 0
    %908 = vmatpush.bf16.msra.mxu0 0
    %909 = vmatpush.bf16.msra.mxu0 %v896
    %910 = vmatpush.bf16.msra.mxu0 %v895
    %911 = vmatpush.bf16.msra.mxu0 %v894
    %912 = vmatpush.bf16.msra.mxu0 %v893
    %913 = vmatmul.bf16.gmra.mxu0 %v903
    %v914 = vpop.f32.mrf.mxu0
    %v915 = vadd.f32 %v875, %v914
    %v916 = vpop.f32.mrf.mxu0
    %v917 = vadd.f32 %v875, %v916
    %918 = vdwg.mxu0
    %v919 = vld [vmem:[%s11] sm:$0x1]
    %v920 = vld [vmem:[%s12] sm:$0x1]
    %v921 = vadd.f32 %v822, %v915
    %v922 = vadd.f32 %v823, %v917
    %v923 = vsel %vm73, %v921, 0.0
    %924 = vadd.xlane.f32.xlu0 %v923
    %v925 = vpop.xlane.xlu0 %924
    %v926 = vsel %vm73, %v922, 0.0
    %927 = vadd.xlane.f32.xlu0 %v926
    %v928 = vpop.xlane.xlu0 %927
    %v929 = vmul.f32 %v925, %v775
    %v930 = vmul.f32 %v928, %v775
    %v931 = vsub.f32 %v921, %v929
    %v932 = vsub.f32 %v922, %v930
    %v933 = vmul.f32 %v931, %v931
    %v934 = vmul.f32 %v932, %v932
    %v935 = vsel %vm73, %v933, 0.0
    %936 = vadd.xlane.f32.xlu0 %v935
    %v937 = vpop.xlane.xlu0 %936
    %v938 = vsel %vm73, %v934, 0.0
    %939 = vadd.xlane.f32.xlu0 %v938
    %v940 = vpop.xlane.xlu0 %939
    %v941 = vmul.f32 %v937, %v775
    %v942 = vmul.f32 %v940, %v775
    %v943 = vadd.f32 %v941, 1e-05
    %v944 = vadd.f32 %v942, 1e-05
    %v945 = vrsqrt.pop %v943
    %v946 = vmul.f32 %v945, %v943
    %v947 = vmul.f32 %v946, %v945
    %v948 = vmul.f32 0.5, %v947
    %v949 = vsub.f32 1.5, %v948
    %v950 = vmul.f32 %v945, %v949
    %vm951 = vweird.f32 %v943
    %vm952 = vweird.f32 %v945
    %vm953 = vmor %vm951, %vm952
    %v954 = vsel %vm953, %v945, %v950
    %v955 = vrsqrt.pop %v944
    %v956 = vmul.f32 %v955, %v944
    %v957 = vmul.f32 %v956, %v955
    %v958 = vmul.f32 0.5, %v957
    %v959 = vsub.f32 1.5, %v958
    %v960 = vmul.f32 %v955, %v959
    %vm961 = vweird.f32 %v944
    %vm962 = vweird.f32 %v955
    %vm963 = vmor %vm961, %vm962
    %v964 = vsel %vm963, %v955, %v960
    %v965 = vmul.f32 %v931, %v954
    %v966 = vmul.f32 %v932, %v964
    %v968 = vperm.slane %v919, 0
    %v970 = vmul.f32 %v965, %v968
    %v971 = vmul.f32 %v966, %v968
    %v973 = vperm.slane %v920, 0
    %v975 = vadd.f32 %v970, %v973
    %v976 = vadd.f32 %v971, %v973
    %v977 = vpack.c.bf16 %v975, %v975
    %v978 = vpack.c.bf16 %v976, %v976
    %vm979 = vcmask 257024
    %980 = vst.msk [vmem:[%s13] sm:$0xf] %vm979, %v977
    %981 = vst.msk [vmem:[%s13 + $0x4] sm:$0xf] %vm979, %v978
    // Predicated region
    $region54: #{my_transformer_encoder.3} parent=1 // pred_check
      _
    $region55: #{my_transformer_encoder.3} parent=1 // pred_check_branch
      %983 = sbr.rel (0) target = $region57
    $region56: #{my_transformer_encoder.3} parent=1 // pred_region
      _
    $region57: #{my_transformer_encoder.3} parent=1 // pred_fallthru
      _
    // Predicated region
    $region58: #{my_transformer_encoder.3} parent=1 // pred_check
      _
    $region59: #{my_transformer_encoder.3} parent=1 // pred_check_branch
      %985 = sbr.rel (0) target = $region61
    $region60: #{my_transformer_encoder.3} parent=1 // pred_region
      %987 = vsyncadd [#allocation3], 0
      %s988 = sshll.u32 [#allocation2], 4
      %s989 = int_to_ptr.vmem [resolvable:$true] %s988
      %s990 = sshll.u32 %s14, 4
      %s991 = int_to_ptr.hbm [resolvable:$true] %s990
      %996 = dma.vmem_to_hbm [thread:$0]  %s989, 256, %s991, [#allocation3], 128, 128, 8
    $region61: #{my_transformer_encoder.3} parent=1 // pred_fallthru
      _
    // Predicated region
    $region62: #{my_transformer_encoder.3} parent=1 // pred_check
      _
    $region63: #{my_transformer_encoder.3} parent=1 // pred_check_branch
      %998 = sbr.rel (0) target = $region65
    $region64: #{my_transformer_encoder.3} parent=1 // pred_region
      _
    $region65: #{my_transformer_encoder.3} parent=1 // pred_fallthru
      _
    // Predicated region
    $region66: #{my_transformer_encoder.3} parent=1 // pred_check
      _
    $region67: #{my_transformer_encoder.3} parent=1 // pred_check_branch
      %1000 = sbr.rel (0) target = $region69
    $region68: #{my_transformer_encoder.3} parent=1 // pred_region
      %1002 = dma.done [#allocation3], 256
    $region69: #{my_transformer_encoder.3} parent=1 // pred_fallthru
      _
    %1003 = vsyncpa [#allocation3], 1

</llo_original>
